<compile_context>
chip_gen: v5e
topology: v5e:2x2
jax: 0.10.0
libtpu: 0.0.40
codegen_flags: <defaults>
</compile_context>

<pallas_src>
import functools
import math

import jax
import jax.numpy as jnp
from jax.experimental import pallas as pl
from jax.experimental.pallas import tpu as pltpu


def _round_up(x, m):
    return ((x + m - 1) // m) * m


def _vmem_limit_bytes():
    """75% of physical VMEM, capped at 112 MiB; 48 MiB fallback (v7x-safe)."""
    cap = None
    try:
        info = pltpu.get_tpu_info()
        cap = getattr(info, "vmem_capacity_bytes", None)
    except Exception:
        cap = None
    if not cap:
        cap = 64 * 1024 * 1024
    return int(min(cap * 3 // 4, 112 * 1024 * 1024))


def _encoder_kernel(
    # ---- inputs ----
    x_ref,        # (TB, S, Din_p)  input features for this batch block
    pos_ref,      # (S, D)          positional encoding (f32)
    emb_w_ref,    # (Din_p, D)
    emb_b_ref,    # (1, D)
    wqkv_ref,     # (1, D, 3D)      current layer, 1/sqrt(dh) folded into q cols
    bqkv_ref,     # (1, 1, 3D)
    wo_ref,       # (1, D, D)       attention output projection
    bo_ref,       # (1, 1, D)
    bn1_s_ref,    # (1, 1, D)
    bn1_b_ref,    # (1, 1, D)
    ff1_w_ref,    # (1, D, F)
    ff1_b_ref,    # (1, 1, F)
    ff2_w_ref,    # (1, F, D)
    ff2_b_ref,    # (1, 1, D)
    bn2_s_ref,    # (1, 1, D)
    bn2_b_ref,    # (1, 1, D)
    fc1_w_ref,    # (D, D2)
    fc1_b_ref,    # (1, D2)
    fc2_w_ref,    # (D2, 1)
    fc2_b_ref,    # (1, 1)
    # ---- output ----
    o_ref,        # (1, TB, 128)    lane-dense output slab (lane 0 is the value)
    # ---- scratch ----
    h_ref,        # (TB, S, D) f32  activations, persistent across the layer axis
    *, n_heads):
    f32 = jnp.float32
    layer = pl.program_id(1)
    n_layers = pl.num_programs(1)

    TB, S, D = h_ref.shape
    M = TB * S
    dh = D // n_heads
    cdt = emb_w_ref.dtype            # matmul compute dtype (f32 or bf16)

    # ---- first layer step: input embedding + positional encoding -----------
    @pl.when(layer == 0)
    def _():
        x2 = x_ref[...].reshape(M, x_ref.shape[-1]).astype(cdt)
        e = jnp.dot(x2, emb_w_ref[...], preferred_element_type=f32)
        e = e + emb_b_ref[...]
        h_ref[...] = e.reshape(TB, S, D) + pos_ref[...][None, :, :]

    # ---- one encoder layer (runs every grid step) ---------------------------
    h2 = h_ref[...].reshape(M, D)
    h2c = h2.astype(cdt)

    # Fused Q/K/V projection: one (M, D) x (D, 3D) matmul -> full MXU width.
    qkv = jnp.dot(h2c, wqkv_ref[0], preferred_element_type=f32) + bqkv_ref[0]

    # Per-head attention core (scores / softmax / context).  Heads occupy
    # contiguous dh-wide lane groups, so slicing is static; the heavy
    # projection matmuls are already fused above.
    ctx_heads = []
    for hd in range(n_heads):
        q = qkv[:, 0 * D + hd * dh: 0 * D + (hd + 1) * dh].reshape(TB, S, dh)
        k = qkv[:, 1 * D + hd * dh: 1 * D + (hd + 1) * dh].reshape(TB, S, dh)
        v = qkv[:, 2 * D + hd * dh: 2 * D + (hd + 1) * dh].reshape(TB, S, dh)
        s = jnp.einsum("bqd,bkd->bqk", q, k, preferred_element_type=f32)
        m = jnp.max(s, axis=-1, keepdims=True)
        p = jnp.exp(s - m)
        p = p * pl.reciprocal(jnp.sum(p, axis=-1, keepdims=True), approx=True)
        ctx = jnp.einsum("bqk,bkd->bqd", p.astype(cdt), v.astype(cdt),
                         preferred_element_type=f32)               # (TB, S, dh)
        ctx_heads.append(ctx.reshape(M, dh))
    ctx_all = jnp.concatenate(ctx_heads, axis=-1)                    # (M, D)

    # Fused output projection: one (M, D) x (D, D) matmul -> full MXU K.
    attn = jnp.dot(ctx_all.astype(cdt), wo_ref[0],
                   preferred_element_type=f32) + bo_ref[0]

    # residual + BatchNorm1 (eval mode folded to affine); dropout = identity
    h2 = (h2 + attn) * bn1_s_ref[0] + bn1_b_ref[0]

    # feed-forward: Linear -> ReLU -> Linear
    ff = jnp.dot(h2.astype(cdt), ff1_w_ref[0],
                 preferred_element_type=f32) + ff1_b_ref[0]
    ff = jnp.maximum(ff, 0.0)
    ff = jnp.dot(ff.astype(cdt), ff2_w_ref[0],
                 preferred_element_type=f32) + ff2_b_ref[0]

    # residual + BatchNorm2
    h2 = (h2 + ff) * bn2_s_ref[0] + bn2_b_ref[0]
    h_ref[...] = h2.reshape(TB, S, D)

    # ---- last layer step: mean-pool over sequence + regression head --------
    @pl.when(layer == n_layers - 1)
    def _():
        pooled = jnp.mean(h2.reshape(TB, S, D), axis=1)              # (TB, D)
        z = jnp.dot(pooled.astype(cdt), fc1_w_ref[...], preferred_element_type=f32)
        z = jnp.maximum(z + fc1_b_ref[...], 0.0)                     # (TB, D2)
        y = jnp.dot(z.astype(cdt), fc2_w_ref[...], preferred_element_type=f32)
        y = y + fc2_b_ref[...]                                       # (TB, 1)
        # lane-dense write: broadcast the per-batch scalar across 128 lanes
        o_ref[0] = jnp.broadcast_to(y, (TB, o_ref.shape[-1]))


def transformer_regressor(x, params, *, n_layers, n_heads, block_b=None,
                          use_bf16=False, interpret=False):
    """x: (B, S, input_dim) f32 -> (B,) f32.  Matches TransformerRegressor.eval()."""
    B, S, Din = x.shape
    D = params["emb_w"].shape[1]
    dh = D // n_heads
    F = params["ff1_w"].shape[-1]
    L = n_layers
    OUT_LANES = 128

    # ---- batch blocking ------------------------------------------------------
    if block_b is None:
        # Target M = TB*S ~ 1024 rows per grid step (amortises the per-layer
        # weight DMA), bounded by a rough per-row activation VMEM budget, and
        # keep >= 2 batch blocks so both v7x TensorCores get work.
        bytes_per_row = 4 * (6 * D + 2 * F)          # h, qkv, ctx, attn, ff, ...
        act_budget = 24 * 1024 * 1024
        rows_cap = max(S, act_budget // max(bytes_per_row, 1))
        target_rows = min(1024, rows_cap)
        block_b = max(1, min(B, target_rows // max(S, 1)))
        if B >= 2:
            block_b = min(block_b, max(1, B // 2))
    TB = block_b
    Bp = _round_up(B, TB)
    nb = Bp // TB

    # ---- pad input feature dim to a lane multiple (zero pad, exact math) ----
    Din_p = _round_up(Din, 128)
    xp = jnp.zeros((Bp, S, Din_p), jnp.float32).at[:B, :, :Din].set(
        x.astype(jnp.float32))

    wdt = jnp.bfloat16 if use_bf16 else jnp.float32

    # ---- wrapper-side weight rearrangement (one-off, outside the kernel) ----
    scale = 1.0 / math.sqrt(dh)
    scale_cols = jnp.concatenate(
        [jnp.full((D,), scale, jnp.float32), jnp.ones((2 * D,), jnp.float32)])
    wqkv = (params["qkv_w"] * scale_cols[None, None, :]).astype(wdt)   # (L,D,3D)
    bqkv = params["qkv_b"] * scale_cols[None, None, :]                 # (L,1,3D)
    wo = params["attn_ow"].astype(wdt)                                 # (L,D,D)
    bo = params["attn_ob"]                                             # (L,1,D)

    emb_w = jnp.zeros((Din_p, D), jnp.float32).at[:Din].set(
        params["emb_w"]).astype(wdt)
    emb_b = params["emb_b"]
    pos = params["pos"]

    ff1_w = params["ff1_w"].astype(wdt); ff1_b = params["ff1_b"]
    ff2_w = params["ff2_w"].astype(wdt); ff2_b = params["ff2_b"]
    bn1_s = params["bn1_s"]; bn1_b = params["bn1_b"]
    bn2_s = params["bn2_s"]; bn2_b = params["bn2_b"]
    fc1_w = params["fc1_w"].astype(wdt); fc1_b = params["fc1_b"]
    fc2_w = params["fc2_w"].astype(wdt); fc2_b = params["fc2_b"]

    layer_params = [wqkv, bqkv, wo, bo, bn1_s, bn1_b,
                    ff1_w, ff1_b, ff2_w, ff2_b, bn2_s, bn2_b]
    head_params = [fc1_w, fc1_b, fc2_w, fc2_b]

    # ---- BlockSpecs ----------------------------------------------------------
    def const_spec(a):                    # loaded once (block index never changes)
        n = a.ndim
        return pl.BlockSpec(a.shape, lambda b, l, _n=n: (0,) * _n)

    def layer_spec(a):                    # streamed per layer along grid axis 1
        n = a.ndim
        return pl.BlockSpec((1,) + a.shape[1:],
                            lambda b, l, _n=n: (l,) + (0,) * (_n - 1))

    in_specs = ([pl.BlockSpec((TB, S, Din_p), lambda b, l: (b, 0, 0))]
                + [const_spec(a) for a in (pos, emb_w, emb_b)]
                + [layer_spec(a) for a in layer_params]
                + [const_spec(a) for a in head_params])

    out_spec = pl.BlockSpec((1, TB, OUT_LANES), lambda b, l: (b, 0, 0))

    kernel = functools.partial(_encoder_kernel, n_heads=n_heads)

    out = pl.pallas_call(
        kernel,
        out_shape=jax.ShapeDtypeStruct((nb, TB, OUT_LANES), jnp.float32),
        grid_spec=pltpu.PrefetchScalarGridSpec(
            num_scalar_prefetch=0,
            grid=(nb, L),                               # batch outer, layer inner
            in_specs=in_specs,
            out_specs=out_spec,
            scratch_shapes=[pltpu.VMEM((TB, S, D), jnp.float32)]),
        compiler_params=pltpu.CompilerParams(
            dimension_semantics=("parallel", "arbitrary"),
            vmem_limit_bytes=_vmem_limit_bytes()),
        interpret=interpret,
    )(xp, pos, emb_w, emb_b, *layer_params, *head_params)

    return out[:, :, 0].reshape(Bp)[:B]


# ---------------------------------------------------------------------------
# deterministic parameter construction (synthetic, matches module __init__
# shapes, all Linear weights pre-transposed to [in, out])
# ---------------------------------------------------------------------------
def make_params(key, *, input_dim, seq_len, d_model, n_heads, n_layers,
                feedforward_dim):
    def nrm(k, shape, scale=0.05):
        return scale * jax.random.normal(k, shape, jnp.float32)

    keys = iter(jax.random.split(key, 64))
    p = {}
    p["emb_w"] = nrm(next(keys), (input_dim, d_model))
    p["emb_b"] = nrm(next(keys), (1, d_model))
    p["pos"] = jax.random.normal(next(keys), (seq_len, d_model), jnp.float32)

    # BatchNorm1d fresh defaults (eval mode): fold into scale/shift
    eps = 1e-5
    gamma = jnp.ones((d_model,), jnp.float32)
    beta = jnp.zeros((d_model,), jnp.float32)
    rmean = jnp.zeros((d_model,), jnp.float32)
    rvar = jnp.ones((d_model,), jnp.float32)
    bn_scale = (gamma / jnp.sqrt(rvar + eps)).reshape(1, d_model)
    bn_shift = (beta - rmean * bn_scale[0]).reshape(1, d_model)

    qkv_w, qkv_b, aow, aob = [], [], [], []
    f1w, f1b, f2w, f2b = [], [], [], []
    bn1s, bn1b, bn2s, bn2b = [], [], [], []
    for _ in range(n_layers):
        qkv_w.append(nrm(next(keys), (d_model, 3 * d_model)))
        qkv_b.append(nrm(next(keys), (1, 3 * d_model)))
        aow.append(nrm(next(keys), (d_model, d_model)))
        aob.append(nrm(next(keys), (1, d_model)))
        f1w.append(nrm(next(keys), (d_model, feedforward_dim)))
        f1b.append(nrm(next(keys), (1, feedforward_dim)))
        f2w.append(nrm(next(keys), (feedforward_dim, d_model)))
        f2b.append(nrm(next(keys), (1, d_model)))
        bn1s.append(bn_scale); bn1b.append(bn_shift)
        bn2s.append(bn_scale); bn2b.append(bn_shift)

    p["qkv_w"] = jnp.stack(qkv_w); p["qkv_b"] = jnp.stack(qkv_b)
    p["attn_ow"] = jnp.stack(aow); p["attn_ob"] = jnp.stack(aob)
    p["ff1_w"] = jnp.stack(f1w);   p["ff1_b"] = jnp.stack(f1b)
    p["ff2_w"] = jnp.stack(f2w);   p["ff2_b"] = jnp.stack(f2b)
    p["bn1_s"] = jnp.stack(bn1s);  p["bn1_b"] = jnp.stack(bn1b)
    p["bn2_s"] = jnp.stack(bn2s);  p["bn2_b"] = jnp.stack(bn2b)

    p["fc1_w"] = nrm(next(keys), (d_model, d_model // 2))
    p["fc1_b"] = nrm(next(keys), (1, d_model // 2))
    p["fc2_w"] = nrm(next(keys), (d_model // 2, 1))
    p["fc2_b"] = nrm(next(keys), (1, 1))
    return p


# pure-JAX reference (same math) for a sanity check
def reference(x, p, *, n_layers, n_heads):
    B, S, Din = x.shape
    D = p["emb_w"].shape[1]
    dh = D // n_heads
    h = x @ p["emb_w"] + p["emb_b"] + p["pos"][None]            # (B, S, D)
    for l in range(n_layers):
        qkv = h @ p["qkv_w"][l] + p["qkv_b"][l]                 # (B, S, 3D)
        heads = []
        for hd in range(n_heads):
            q = qkv[..., hd * dh:(hd + 1) * dh]
            k = qkv[..., D + hd * dh: D + (hd + 1) * dh]
            v = qkv[..., 2 * D + hd * dh: 2 * D + (hd + 1) * dh]
            s = jnp.einsum("bsd,btd->bst", q, k) / math.sqrt(dh)
            pw = jax.nn.softmax(s, axis=-1)
            heads.append(jnp.einsum("bst,btd->bsd", pw, v))
        attn = jnp.concatenate(heads, axis=-1) @ p["attn_ow"][l] + p["attn_ob"][l]
        h = (h + attn) * p["bn1_s"][l] + p["bn1_b"][l]
        ff = jnp.maximum(h @ p["ff1_w"][l] + p["ff1_b"][l], 0.0) @ p["ff2_w"][l] + p["ff2_b"][l]
        h = (h + ff) * p["bn2_s"][l] + p["bn2_b"][l]
    pooled = h.mean(axis=1)
    z = jnp.maximum(pooled @ p["fc1_w"] + p["fc1_b"], 0.0)
    return (z @ p["fc2_w"] + p["fc2_b"]).reshape(B)


if __name__ == "__main__":
    # Small but lane-realistic shapes: d_model = 128 (module default) so the
    # kernel exercises lane-aligned slabs; input_dim = 9 exercises the padding.
    B, S, Din = 4, 8, 9
    D, H, L, F = 128, 4, 2, 256

    key = jax.random.PRNGKey(0)
    kx, kp = jax.random.split(key)
    x = jax.random.normal(kx, (B, S, Din), jnp.float32)
    params = make_params(kp, input_dim=Din, seq_len=S, d_model=D,
                         n_heads=H, n_layers=L, feedforward_dim=F)

    # f32 validation path (use_bf16=True is the v5e/v6e/v7x fast path; it
    # perturbs results at ~1e-2 relative, so the check runs the f32 path).
    out = transformer_regressor(x, params, n_layers=L, n_heads=H)
    out = jax.block_until_ready(out)

    ref = reference(x, params, n_layers=L, n_heads=H)
    assert out.shape == (B,)
    # tolerance accounts for the EUP approximate reciprocal in softmax
    assert jnp.allclose(out, ref, rtol=2e-2, atol=2e-2), (out, ref)
    print("KERNEL_OK")
</pallas_src>

<mosaic_0001>
module attributes {stable_mosaic.version = 11 : i64} {
  func.func @_encoder_kernel(%arg0: i32, %arg1: i32, %arg2: memref<2x8x128xf32, #tpu.memory_space<vmem>>, %arg3: memref<8x128xf32, #tpu.memory_space<vmem>>, %arg4: memref<128x128xf32, #tpu.memory_space<vmem>>, %arg5: memref<1x128xf32, #tpu.memory_space<vmem>>, %arg6: memref<1x128x384xf32, #tpu.memory_space<vmem>>, %arg7: memref<1x1x384xf32, #tpu.memory_space<vmem>>, %arg8: memref<1x128x128xf32, #tpu.memory_space<vmem>>, %arg9: memref<1x1x128xf32, #tpu.memory_space<vmem>>, %arg10: memref<1x1x128xf32, #tpu.memory_space<vmem>>, %arg11: memref<1x1x128xf32, #tpu.memory_space<vmem>>, %arg12: memref<1x128x256xf32, #tpu.memory_space<vmem>>, %arg13: memref<1x1x256xf32, #tpu.memory_space<vmem>>, %arg14: memref<1x256x128xf32, #tpu.memory_space<vmem>>, %arg15: memref<1x1x128xf32, #tpu.memory_space<vmem>>, %arg16: memref<1x1x128xf32, #tpu.memory_space<vmem>>, %arg17: memref<1x1x128xf32, #tpu.memory_space<vmem>>, %arg18: memref<128x64xf32, #tpu.memory_space<vmem>>, %arg19: memref<1x64xf32, #tpu.memory_space<vmem>>, %arg20: memref<64x1xf32, #tpu.memory_space<vmem>>, %arg21: memref<1x1xf32, #tpu.memory_space<vmem>>, %arg22: memref<1x2x128xf32, #tpu.memory_space<vmem>>, %arg23: memref<2x8x128xf32, #tpu.memory_space<vmem>>) attributes {dimension_semantics = [#tpu.dimension_semantics<parallel>, #tpu.dimension_semantics<arbitrary>], iteration_bounds = array<i64: 2, 2>, scalar_prefetch = 0 : i64, scratch_operands = 1 : i64, tpu.core_type = #tpu.core_type<tc>, window_params = [{transform_indices = @transform_0, window_bounds = array<i64: 2, 8, 128>}, {pipeline_mode = #tpu.pipeline_mode<synchronous>, transform_indices = @transform_1, window_bounds = array<i64: 8, 128>}, {pipeline_mode = #tpu.pipeline_mode<synchronous>, transform_indices = @transform_2, window_bounds = array<i64: 128, 128>}, {pipeline_mode = #tpu.pipeline_mode<synchronous>, transform_indices = @transform_3, window_bounds = array<i64: 1, 128>}, {transform_indices = @transform_4, window_bounds = array<i64: 1, 128, 384>}, {transform_indices = @transform_5, window_bounds = array<i64: 1, 1, 384>}, {transform_indices = @transform_6, window_bounds = array<i64: 1, 128, 128>}, {transform_indices = @transform_7, window_bounds = array<i64: 1, 1, 128>}, {transform_indices = @transform_8, window_bounds = array<i64: 1, 1, 128>}, {transform_indices = @transform_9, window_bounds = array<i64: 1, 1, 128>}, {transform_indices = @transform_10, window_bounds = array<i64: 1, 128, 256>}, {transform_indices = @transform_11, window_bounds = array<i64: 1, 1, 256>}, {transform_indices = @transform_12, window_bounds = array<i64: 1, 256, 128>}, {transform_indices = @transform_13, window_bounds = array<i64: 1, 1, 128>}, {transform_indices = @transform_14, window_bounds = array<i64: 1, 1, 128>}, {transform_indices = @transform_15, window_bounds = array<i64: 1, 1, 128>}, {pipeline_mode = #tpu.pipeline_mode<synchronous>, transform_indices = @transform_16, window_bounds = array<i64: 128, 64>}, {pipeline_mode = #tpu.pipeline_mode<synchronous>, transform_indices = @transform_17, window_bounds = array<i64: 1, 64>}, {pipeline_mode = #tpu.pipeline_mode<synchronous>, transform_indices = @transform_18, window_bounds = array<i64: 64, 1>}, {pipeline_mode = #tpu.pipeline_mode<synchronous>, transform_indices = @transform_19, window_bounds = array<i64: 1, 1>}, {transform_indices = @transform_20, window_bounds = array<i64: 1, 2, 128>}]} {
    %c0_i32 = arith.constant 0 : i32
    %0 = arith.cmpi eq, %arg1, %c0_i32 : i32
    %1 = arith.extui %0 : i1 to i32
    %c0_i32_0 = arith.constant 0 : i32
    %2 = arith.cmpi ne, %1, %c0_i32_0 : i32
    scf.if %2 {
      %c0_63 = arith.constant 0 : index
      %c0_64 = arith.constant 0 : index
      %c0_65 = arith.constant 0 : index
      %135 = vector.load %arg2[%c0_63, %c0_64, %c0_65] : memref<2x8x128xf32, #tpu.memory_space<vmem>>, vector<2x8x128xf32>
      %136 = vector.shape_cast %135 : vector<2x8x128xf32> to vector<16x128xf32>
      %c0_66 = arith.constant 0 : index
      %c0_67 = arith.constant 0 : index
      %137 = vector.load %arg4[%c0_66, %c0_67] : memref<128x128xf32, #tpu.memory_space<vmem>>, vector<128x128xf32>
      %cst_68 = arith.constant dense<0.000000e+00> : vector<16x128xf32>
      %138 = tpu.matmul %136, %137, %cst_68 {dimension_numbers = #tpu.dot_dimension_numbers<[1], [0], [0], [1], [0, 0, 1, 1], [], []>} : vector<16x128xf32>, vector<128x128xf32>, vector<16x128xf32> -> vector<16x128xf32>
      %c0_69 = arith.constant 0 : index
      %c0_70 = arith.constant 0 : index
      %139 = vector.load %arg5[%c0_69, %c0_70] : memref<1x128xf32, #tpu.memory_space<vmem>>, vector<1x128xf32>
      %140 = vector.broadcast %139 : vector<1x128xf32> to vector<16x128xf32>
      %141 = arith.addf %138, %140 : vector<16x128xf32>
      %142 = vector.shape_cast %141 : vector<16x128xf32> to vector<2x8x128xf32>
      %c0_71 = arith.constant 0 : index
      %c0_72 = arith.constant 0 : index
      %143 = vector.load %arg3[%c0_71, %c0_72] : memref<8x128xf32, #tpu.memory_space<vmem>>, vector<8x128xf32>
      %144 = vector.shape_cast %143 : vector<8x128xf32> to vector<1x8x128xf32>
      %145 = vector.broadcast %144 : vector<1x8x128xf32> to vector<2x8x128xf32>
      %146 = arith.addf %142, %145 : vector<2x8x128xf32>
      %c0_73 = arith.constant 0 : index
      %c0_74 = arith.constant 0 : index
      %c0_75 = arith.constant 0 : index
      %147 = vector.load %arg23[%c0_73, %c0_74, %c0_75] : memref<2x8x128xf32, #tpu.memory_space<vmem>>, vector<2x8x128xf32>
      tpu.vector_store %arg23[%c0_73, %c0_74, %c0_75], %146 {strides = array<i32>} : memref<2x8x128xf32, #tpu.memory_space<vmem>>, vector<2x8x128xf32>,
    } else {
    }
    %c0 = arith.constant 0 : index
    %c0_1 = arith.constant 0 : index
    %c0_2 = arith.constant 0 : index
    %3 = vector.load %arg23[%c0, %c0_1, %c0_2] : memref<2x8x128xf32, #tpu.memory_space<vmem>>, vector<2x8x128xf32>
    %4 = vector.shape_cast %3 : vector<2x8x128xf32> to vector<16x128xf32>
    %c0_3 = arith.constant 0 : index
    %c0_4 = arith.constant 0 : index
    %c0_5 = arith.constant 0 : index
    %5 = vector.load %arg6[%c0_3, %c0_4, %c0_5] : memref<1x128x384xf32, #tpu.memory_space<vmem>>, vector<1x128x384xf32>
    %6 = vector.shape_cast %5 : vector<1x128x384xf32> to vector<128x384xf32>
    %cst = arith.constant dense<0.000000e+00> : vector<16x384xf32>
    %7 = tpu.matmul %4, %6, %cst {dimension_numbers = #tpu.dot_dimension_numbers<[1], [0], [0], [1], [0, 0, 1, 1], [], []>} : vector<16x128xf32>, vector<128x384xf32>, vector<16x384xf32> -> vector<16x384xf32>
    %c0_6 = arith.constant 0 : index
    %c0_7 = arith.constant 0 : index
    %c0_8 = arith.constant 0 : index
    %8 = vector.load %arg7[%c0_6, %c0_7, %c0_8] : memref<1x1x384xf32, #tpu.memory_space<vmem>>, vector<1x1x384xf32>
    %9 = vector.shape_cast %8 : vector<1x1x384xf32> to vector<1x384xf32>
    %10 = vector.broadcast %9 : vector<1x384xf32> to vector<16x384xf32>
    %11 = arith.addf %7, %10 : vector<16x384xf32>
    %12 = vector.extract_strided_slice %11 {offsets = [0, 0], sizes = [16, 32], strides = [1, 1]} : vector<16x384xf32> to vector<16x32xf32>
    %13 = vector.shape_cast %12 : vector<16x32xf32> to vector<2x8x32xf32>
    %14 = vector.extract_strided_slice %11 {offsets = [0, 128], sizes = [16, 32], strides = [1, 1]} : vector<16x384xf32> to vector<16x32xf32>
    %15 = vector.shape_cast %14 : vector<16x32xf32> to vector<2x8x32xf32>
    %16 = vector.extract_strided_slice %11 {offsets = [0, 256], sizes = [16, 32], strides = [1, 1]} : vector<16x384xf32> to vector<16x32xf32>
    %17 = vector.shape_cast %16 : vector<16x32xf32> to vector<2x8x32xf32>
    "tpu.trace_start"() <{level = 10 : i32, message = "bqd,bkd->bqk"}> : () -> ()
    %cst_9 = arith.constant dense<0.000000e+00> : vector<2x8x8xf32>
    %18 = tpu.matmul %13, %15, %cst_9 {dimension_numbers = #tpu.dot_dimension_numbers<[2], [2], [1], [1], [0, 0, 0, 1, 1, 1], [0], [0]>} : vector<2x8x32xf32>, vector<2x8x32xf32>, vector<2x8x8xf32> -> vector<2x8x8xf32>
    "tpu.trace_stop"() : () -> ()
    %cst_10 = arith.constant dense<0xFF800000> : vector<2x8xf32>
    %19 = vector.multi_reduction <maximumf>, %18, %cst_10 [2] : vector<2x8x8xf32> to vector<2x8xf32>
    %20 = vector.shape_cast %19 : vector<2x8xf32> to vector<2x8x1xf32>
    %21 = vector.broadcast %20 : vector<2x8x1xf32> to vector<2x8x8xf32>
    %22 = arith.subf %18, %21 : vector<2x8x8xf32>
    %23 = math.exp %22 : vector<2x8x8xf32>
    %cst_11 = arith.constant dense<0.000000e+00> : vector<2x8xf32>
    %24 = vector.multi_reduction <add>, %23, %cst_11 [2] : vector<2x8x8xf32> to vector<2x8xf32>
    %25 = vector.shape_cast %24 : vector<2x8xf32> to vector<2x8x1xf32>
    %26 = tpu.reciprocal %25 {approx = true} : vector<2x8x1xf32> -> vector<2x8x1xf32>
    %27 = vector.broadcast %26 : vector<2x8x1xf32> to vector<2x8x8xf32>
    %28 = arith.mulf %23, %27 : vector<2x8x8xf32>
    "tpu.trace_start"() <{level = 10 : i32, message = "bqk,bkd->bqd"}> : () -> ()
    %cst_12 = arith.constant dense<0.000000e+00> : vector<2x8x32xf32>
    %29 = tpu.matmul %28, %17, %cst_12 {dimension_numbers = #tpu.dot_dimension_numbers<[2], [1], [1], [2], [0, 0, 0, 1, 1, 2], [0], [0]>} : vector<2x8x8xf32>, vector<2x8x32xf32>, vector<2x8x32xf32> -> vector<2x8x32xf32>
    "tpu.trace_stop"() : () -> ()
    %30 = vector.shape_cast %29 : vector<2x8x32xf32> to vector<16x32xf32>
    %31 = vector.extract_strided_slice %11 {offsets = [0, 32], sizes = [16, 32], strides = [1, 1]} : vector<16x384xf32> to vector<16x32xf32>
    %32 = vector.shape_cast %31 : vector<16x32xf32> to vector<2x8x32xf32>
    %33 = vector.extract_strided_slice %11 {offsets = [0, 160], sizes = [16, 32], strides = [1, 1]} : vector<16x384xf32> to vector<16x32xf32>
    %34 = vector.shape_cast %33 : vector<16x32xf32> to vector<2x8x32xf32>
    %35 = vector.extract_strided_slice %11 {offsets = [0, 288], sizes = [16, 32], strides = [1, 1]} : vector<16x384xf32> to vector<16x32xf32>
    %36 = vector.shape_cast %35 : vector<16x32xf32> to vector<2x8x32xf32>
    "tpu.trace_start"() <{level = 10 : i32, message = "bqd,bkd->bqk"}> : () -> ()
    %cst_13 = arith.constant dense<0.000000e+00> : vector<2x8x8xf32>
    %37 = tpu.matmul %32, %34, %cst_13 {dimension_numbers = #tpu.dot_dimension_numbers<[2], [2], [1], [1], [0, 0, 0, 1, 1, 1], [0], [0]>} : vector<2x8x32xf32>, vector<2x8x32xf32>, vector<2x8x8xf32> -> vector<2x8x8xf32>
    "tpu.trace_stop"() : () -> ()
    %cst_14 = arith.constant dense<0xFF800000> : vector<2x8xf32>
    %38 = vector.multi_reduction <maximumf>, %37, %cst_14 [2] : vector<2x8x8xf32> to vector<2x8xf32>
    %39 = vector.shape_cast %38 : vector<2x8xf32> to vector<2x8x1xf32>
    %40 = vector.broadcast %39 : vector<2x8x1xf32> to vector<2x8x8xf32>
    %41 = arith.subf %37, %40 : vector<2x8x8xf32>
    %42 = math.exp %41 : vector<2x8x8xf32>
    %cst_15 = arith.constant dense<0.000000e+00> : vector<2x8xf32>
    %43 = vector.multi_reduction <add>, %42, %cst_15 [2] : vector<2x8x8xf32> to vector<2x8xf32>
    %44 = vector.shape_cast %43 : vector<2x8xf32> to vector<2x8x1xf32>
    %45 = tpu.reciprocal %44 {approx = true} : vector<2x8x1xf32> -> vector<2x8x1xf32>
    %46 = vector.broadcast %45 : vector<2x8x1xf32> to vector<2x8x8xf32>
    %47 = arith.mulf %42, %46 : vector<2x8x8xf32>
    "tpu.trace_start"() <{level = 10 : i32, message = "bqk,bkd->bqd"}> : () -> ()
    %cst_16 = arith.constant dense<0.000000e+00> : vector<2x8x32xf32>
    %48 = tpu.matmul %47, %36, %cst_16 {dimension_numbers = #tpu.dot_dimension_numbers<[2], [1], [1], [2], [0, 0, 0, 1, 1, 2], [0], [0]>} : vector<2x8x8xf32>, vector<2x8x32xf32>, vector<2x8x32xf32> -> vector<2x8x32xf32>
    "tpu.trace_stop"() : () -> ()
    %49 = vector.shape_cast %48 : vector<2x8x32xf32> to vector<16x32xf32>
    %50 = vector.extract_strided_slice %11 {offsets = [0, 64], sizes = [16, 32], strides = [1, 1]} : vector<16x384xf32> to vector<16x32xf32>
    %51 = vector.shape_cast %50 : vector<16x32xf32> to vector<2x8x32xf32>
    %52 = vector.extract_strided_slice %11 {offsets = [0, 192], sizes = [16, 32], strides = [1, 1]} : vector<16x384xf32> to vector<16x32xf32>
    %53 = vector.shape_cast %52 : vector<16x32xf32> to vector<2x8x32xf32>
    %54 = vector.extract_strided_slice %11 {offsets = [0, 320], sizes = [16, 32], strides = [1, 1]} : vector<16x384xf32> to vector<16x32xf32>
    %55 = vector.shape_cast %54 : vector<16x32xf32> to vector<2x8x32xf32>
    "tpu.trace_start"() <{level = 10 : i32, message = "bqd,bkd->bqk"}> : () -> ()
    %cst_17 = arith.constant dense<0.000000e+00> : vector<2x8x8xf32>
    %56 = tpu.matmul %51, %53, %cst_17 {dimension_numbers = #tpu.dot_dimension_numbers<[2], [2], [1], [1], [0, 0, 0, 1, 1, 1], [0], [0]>} : vector<2x8x32xf32>, vector<2x8x32xf32>, vector<2x8x8xf32> -> vector<2x8x8xf32>
    "tpu.trace_stop"() : () -> ()
    %cst_18 = arith.constant dense<0xFF800000> : vector<2x8xf32>
    %57 = vector.multi_reduction <maximumf>, %56, %cst_18 [2] : vector<2x8x8xf32> to vector<2x8xf32>
    %58 = vector.shape_cast %57 : vector<2x8xf32> to vector<2x8x1xf32>
    %59 = vector.broadcast %58 : vector<2x8x1xf32> to vector<2x8x8xf32>
    %60 = arith.subf %56, %59 : vector<2x8x8xf32>
    %61 = math.exp %60 : vector<2x8x8xf32>
    %cst_19 = arith.constant dense<0.000000e+00> : vector<2x8xf32>
    %62 = vector.multi_reduction <add>, %61, %cst_19 [2] : vector<2x8x8xf32> to vector<2x8xf32>
    %63 = vector.shape_cast %62 : vector<2x8xf32> to vector<2x8x1xf32>
    %64 = tpu.reciprocal %63 {approx = true} : vector<2x8x1xf32> -> vector<2x8x1xf32>
    %65 = vector.broadcast %64 : vector<2x8x1xf32> to vector<2x8x8xf32>
    %66 = arith.mulf %61, %65 : vector<2x8x8xf32>
    "tpu.trace_start"() <{level = 10 : i32, message = "bqk,bkd->bqd"}> : () -> ()
    %cst_20 = arith.constant dense<0.000000e+00> : vector<2x8x32xf32>
    %67 = tpu.matmul %66, %55, %cst_20 {dimension_numbers = #tpu.dot_dimension_numbers<[2], [1], [1], [2], [0, 0, 0, 1, 1, 2], [0], [0]>} : vector<2x8x8xf32>, vector<2x8x32xf32>, vector<2x8x32xf32> -> vector<2x8x32xf32>
    "tpu.trace_stop"() : () -> ()
    %68 = vector.shape_cast %67 : vector<2x8x32xf32> to vector<16x32xf32>
    %69 = vector.extract_strided_slice %11 {offsets = [0, 96], sizes = [16, 32], strides = [1, 1]} : vector<16x384xf32> to vector<16x32xf32>
    %70 = vector.shape_cast %69 : vector<16x32xf32> to vector<2x8x32xf32>
    %71 = vector.extract_strided_slice %11 {offsets = [0, 224], sizes = [16, 32], strides = [1, 1]} : vector<16x384xf32> to vector<16x32xf32>
    %72 = vector.shape_cast %71 : vector<16x32xf32> to vector<2x8x32xf32>
    %73 = vector.extract_strided_slice %11 {offsets = [0, 352], sizes = [16, 32], strides = [1, 1]} : vector<16x384xf32> to vector<16x32xf32>
    %74 = vector.shape_cast %73 : vector<16x32xf32> to vector<2x8x32xf32>
    "tpu.trace_start"() <{level = 10 : i32, message = "bqd,bkd->bqk"}> : () -> ()
    %cst_21 = arith.constant dense<0.000000e+00> : vector<2x8x8xf32>
    %75 = tpu.matmul %70, %72, %cst_21 {dimension_numbers = #tpu.dot_dimension_numbers<[2], [2], [1], [1], [0, 0, 0, 1, 1, 1], [0], [0]>} : vector<2x8x32xf32>, vector<2x8x32xf32>, vector<2x8x8xf32> -> vector<2x8x8xf32>
    "tpu.trace_stop"() : () -> ()
    %cst_22 = arith.constant dense<0xFF800000> : vector<2x8xf32>
    %76 = vector.multi_reduction <maximumf>, %75, %cst_22 [2] : vector<2x8x8xf32> to vector<2x8xf32>
    %77 = vector.shape_cast %76 : vector<2x8xf32> to vector<2x8x1xf32>
    %78 = vector.broadcast %77 : vector<2x8x1xf32> to vector<2x8x8xf32>
    %79 = arith.subf %75, %78 : vector<2x8x8xf32>
    %80 = math.exp %79 : vector<2x8x8xf32>
    %cst_23 = arith.constant dense<0.000000e+00> : vector<2x8xf32>
    %81 = vector.multi_reduction <add>, %80, %cst_23 [2] : vector<2x8x8xf32> to vector<2x8xf32>
    %82 = vector.shape_cast %81 : vector<2x8xf32> to vector<2x8x1xf32>
    %83 = tpu.reciprocal %82 {approx = true} : vector<2x8x1xf32> -> vector<2x8x1xf32>
    %84 = vector.broadcast %83 : vector<2x8x1xf32> to vector<2x8x8xf32>
    %85 = arith.mulf %80, %84 : vector<2x8x8xf32>
    "tpu.trace_start"() <{level = 10 : i32, message = "bqk,bkd->bqd"}> : () -> ()
    %cst_24 = arith.constant dense<0.000000e+00> : vector<2x8x32xf32>
    %86 = tpu.matmul %85, %74, %cst_24 {dimension_numbers = #tpu.dot_dimension_numbers<[2], [1], [1], [2], [0, 0, 0, 1, 1, 2], [0], [0]>} : vector<2x8x8xf32>, vector<2x8x32xf32>, vector<2x8x32xf32> -> vector<2x8x32xf32>
    "tpu.trace_stop"() : () -> ()
    %87 = vector.shape_cast %86 : vector<2x8x32xf32> to vector<16x32xf32>
    %88 = tpu.concatenate %30, %49, %68, %87 in 1 : vector<16x32xf32>, vector<16x32xf32>, vector<16x32xf32>, vector<16x32xf32> -> vector<16x128xf32>
    %c0_25 = arith.constant 0 : index
    %c0_26 = arith.constant 0 : index
    %c0_27 = arith.constant 0 : index
    %89 = vector.load %arg8[%c0_25, %c0_26, %c0_27] : memref<1x128x128xf32, #tpu.memory_space<vmem>>, vector<1x128x128xf32>
    %90 = vector.shape_cast %89 : vector<1x128x128xf32> to vector<128x128xf32>
    %cst_28 = arith.constant dense<0.000000e+00> : vector<16x128xf32>
    %91 = tpu.matmul %88, %90, %cst_28 {dimension_numbers = #tpu.dot_dimension_numbers<[1], [0], [0], [1], [0, 0, 1, 1], [], []>} : vector<16x128xf32>, vector<128x128xf32>, vector<16x128xf32> -> vector<16x128xf32>
    %c0_29 = arith.constant 0 : index
    %c0_30 = arith.constant 0 : index
    %c0_31 = arith.constant 0 : index
    %92 = vector.load %arg9[%c0_29, %c0_30, %c0_31] : memref<1x1x128xf32, #tpu.memory_space<vmem>>, vector<1x1x128xf32>
    %93 = vector.shape_cast %92 : vector<1x1x128xf32> to vector<1x128xf32>
    %94 = vector.broadcast %93 : vector<1x128xf32> to vector<16x128xf32>
    %95 = arith.addf %91, %94 : vector<16x128xf32>
    %96 = arith.addf %4, %95 : vector<16x128xf32>
    %c0_32 = arith.constant 0 : index
    %c0_33 = arith.constant 0 : index
    %c0_34 = arith.constant 0 : index
    %97 = vector.load %arg10[%c0_32, %c0_33, %c0_34] : memref<1x1x128xf32, #tpu.memory_space<vmem>>, vector<1x1x128xf32>
    %98 = vector.shape_cast %97 : vector<1x1x128xf32> to vector<1x128xf32>
    %99 = vector.broadcast %98 : vector<1x128xf32> to vector<16x128xf32>
    %100 = arith.mulf %96, %99 : vector<16x128xf32>
    %c0_35 = arith.constant 0 : index
    %c0_36 = arith.constant 0 : index
    %c0_37 = arith.constant 0 : index
    %101 = vector.load %arg11[%c0_35, %c0_36, %c0_37] : memref<1x1x128xf32, #tpu.memory_space<vmem>>, vector<1x1x128xf32>
    %102 = vector.shape_cast %101 : vector<1x1x128xf32> to vector<1x128xf32>
    %103 = vector.broadcast %102 : vector<1x128xf32> to vector<16x128xf32>
    %104 = arith.addf %100, %103 : vector<16x128xf32>
    %c0_38 = arith.constant 0 : index
    %c0_39 = arith.constant 0 : index
    %c0_40 = arith.constant 0 : index
    %105 = vector.load %arg12[%c0_38, %c0_39, %c0_40] : memref<1x128x256xf32, #tpu.memory_space<vmem>>, vector<1x128x256xf32>
    %106 = vector.shape_cast %105 : vector<1x128x256xf32> to vector<128x256xf32>
    %cst_41 = arith.constant dense<0.000000e+00> : vector<16x256xf32>
    %107 = tpu.matmul %104, %106, %cst_41 {dimension_numbers = #tpu.dot_dimension_numbers<[1], [0], [0], [1], [0, 0, 1, 1], [], []>} : vector<16x128xf32>, vector<128x256xf32>, vector<16x256xf32> -> vector<16x256xf32>
    %c0_42 = arith.constant 0 : index
    %c0_43 = arith.constant 0 : index
    %c0_44 = arith.constant 0 : index
    %108 = vector.load %arg13[%c0_42, %c0_43, %c0_44] : memref<1x1x256xf32, #tpu.memory_space<vmem>>, vector<1x1x256xf32>
    %109 = vector.shape_cast %108 : vector<1x1x256xf32> to vector<1x256xf32>
    %110 = vector.broadcast %109 : vector<1x256xf32> to vector<16x256xf32>
    %111 = arith.addf %107, %110 : vector<16x256xf32>
    %cst_45 = arith.constant 0.000000e+00 : f32
    %112 = vector.broadcast %cst_45 : f32 to vector<16x256xf32>
    %113 = arith.maximumf %111, %112 : vector<16x256xf32>
    %c0_46 = arith.constant 0 : index
    %c0_47 = arith.constant 0 : index
    %c0_48 = arith.constant 0 : index
    %114 = vector.load %arg14[%c0_46, %c0_47, %c0_48] : memref<1x256x128xf32, #tpu.memory_space<vmem>>, vector<1x256x128xf32>
    %115 = vector.shape_cast %114 : vector<1x256x128xf32> to vector<256x128xf32>
    %cst_49 = arith.constant dense<0.000000e+00> : vector<16x128xf32>
    %116 = tpu.matmul %113, %115, %cst_49 {dimension_numbers = #tpu.dot_dimension_numbers<[1], [0], [0], [1], [0, 0, 1, 1], [], []>} : vector<16x256xf32>, vector<256x128xf32>, vector<16x128xf32> -> vector<16x128xf32>
    %c0_50 = arith.constant 0 : index
    %c0_51 = arith.constant 0 : index
    %c0_52 = arith.constant 0 : index
    %117 = vector.load %arg15[%c0_50, %c0_51, %c0_52] : memref<1x1x128xf32, #tpu.memory_space<vmem>>, vector<1x1x128xf32>
    %118 = vector.shape_cast %117 : vector<1x1x128xf32> to vector<1x128xf32>
    %119 = vector.broadcast %118 : vector<1x128xf32> to vector<16x128xf32>
    %120 = arith.addf %116, %119 : vector<16x128xf32>
    %121 = arith.addf %104, %120 : vector<16x128xf32>
    %c0_53 = arith.constant 0 : index
    %c0_54 = arith.constant 0 : index
    %c0_55 = arith.constant 0 : index
    %122 = vector.load %arg16[%c0_53, %c0_54, %c0_55] : memref<1x1x128xf32, #tpu.memory_space<vmem>>, vector<1x1x128xf32>
    %123 = vector.shape_cast %122 : vector<1x1x128xf32> to vector<1x128xf32>
    %124 = vector.broadcast %123 : vector<1x128xf32> to vector<16x128xf32>
    %125 = arith.mulf %121, %124 : vector<16x128xf32>
    %c0_56 = arith.constant 0 : index
    %c0_57 = arith.constant 0 : index
    %c0_58 = arith.constant 0 : index
    %126 = vector.load %arg17[%c0_56, %c0_57, %c0_58] : memref<1x1x128xf32, #tpu.memory_space<vmem>>, vector<1x1x128xf32>
    %127 = vector.shape_cast %126 : vector<1x1x128xf32> to vector<1x128xf32>
    %128 = vector.broadcast %127 : vector<1x128xf32> to vector<16x128xf32>
    %129 = arith.addf %125, %128 : vector<16x128xf32>
    %130 = vector.shape_cast %129 : vector<16x128xf32> to vector<2x8x128xf32>
    %c0_59 = arith.constant 0 : index
    %c0_60 = arith.constant 0 : index
    %c0_61 = arith.constant 0 : index
    %131 = vector.load %arg23[%c0_59, %c0_60, %c0_61] : memref<2x8x128xf32, #tpu.memory_space<vmem>>, vector<2x8x128xf32>
    tpu.vector_store %arg23[%c0_59, %c0_60, %c0_61], %130 {strides = array<i32>} : memref<2x8x128xf32, #tpu.memory_space<vmem>>, vector<2x8x128xf32>,
    %c1_i32 = arith.constant 1 : i32
    %132 = arith.cmpi eq, %arg1, %c1_i32 : i32
    %133 = arith.extui %132 : i1 to i32
    %c0_i32_62 = arith.constant 0 : i32
    %134 = arith.cmpi ne, %133, %c0_i32_62 : i32
    scf.if %134 {
      %135 = vector.shape_cast %129 : vector<16x128xf32> to vector<2x8x128xf32>
      %cst_63 = arith.constant dense<0.000000e+00> : vector<2x128xf32>
      %136 = vector.multi_reduction <add>, %135, %cst_63 [1] : vector<2x8x128xf32> to vector<2x128xf32>
      %cst_64 = arith.constant 8.000000e+00 : f32
      %137 = vector.broadcast %cst_64 : f32 to vector<2x128xf32>
      %138 = arith.divf %136, %137 : vector<2x128xf32>
      %c0_65 = arith.constant 0 : index
      %c0_66 = arith.constant 0 : index
      %139 = vector.load %arg18[%c0_65, %c0_66] : memref<128x64xf32, #tpu.memory_space<vmem>>, vector<128x64xf32>
      %cst_67 = arith.constant dense<0.000000e+00> : vector<2x64xf32>
      %140 = tpu.matmul %138, %139, %cst_67 {dimension_numbers = #tpu.dot_dimension_numbers<[1], [0], [0], [1], [0, 0, 1, 1], [], []>} : vector<2x128xf32>, vector<128x64xf32>, vector<2x64xf32> -> vector<2x64xf32>
      %c0_68 = arith.constant 0 : index
      %c0_69 = arith.constant 0 : index
      %141 = vector.load %arg19[%c0_68, %c0_69] : memref<1x64xf32, #tpu.memory_space<vmem>>, vector<1x64xf32>
      %142 = vector.broadcast %141 : vector<1x64xf32> to vector<2x64xf32>
      %143 = arith.addf %140, %142 : vector<2x64xf32>
      %cst_70 = arith.constant 0.000000e+00 : f32
      %144 = vector.broadcast %cst_70 : f32 to vector<2x64xf32>
      %145 = arith.maximumf %143, %144 : vector<2x64xf32>
      %c0_71 = arith.constant 0 : index
      %c0_72 = arith.constant 0 : index
      %146 = vector.load %arg20[%c0_71, %c0_72] : memref<64x1xf32, #tpu.memory_space<vmem>>, vector<64x1xf32>
      %cst_73 = arith.constant dense<0.000000e+00> : vector<2x1xf32>
      %147 = tpu.matmul %145, %146, %cst_73 {dimension_numbers = #tpu.dot_dimension_numbers<[1], [0], [0], [1], [0, 0, 1, 1], [], []>} : vector<2x64xf32>, vector<64x1xf32>, vector<2x1xf32> -> vector<2x1xf32>
      %c0_74 = arith.constant 0 : index
      %c0_75 = arith.constant 0 : index
      %148 = vector.load %arg21[%c0_74, %c0_75] : memref<1x1xf32, #tpu.memory_space<vmem>>, vector<1x1xf32>
      %149 = vector.broadcast %148 : vector<1x1xf32> to vector<2x1xf32>
      %150 = arith.addf %147, %149 : vector<2x1xf32>
      %151 = vector.shape_cast %150 : vector<2x1xf32> to vector<2x1xf32>
      %152 = vector.broadcast %151 : vector<2x1xf32> to vector<2x128xf32>
      %c0_76 = arith.constant 0 : index
      %c0_77 = arith.constant 0 : index
      %c0_78 = arith.constant 0 : index
      %153 = vector.load %arg22[%c0_76, %c0_77, %c0_78] : memref<1x2x128xf32, #tpu.memory_space<vmem>>, vector<1x2x128xf32>
      %154 = vector.shape_cast %153 : vector<1x2x128xf32> to vector<2x128xf32>
      %155 = vector.shape_cast %152 : vector<2x128xf32> to vector<1x2x128xf32>
      tpu.vector_store %arg22[%c0_76, %c0_77, %c0_78], %155 {strides = array<i32>} : memref<1x2x128xf32, #tpu.memory_space<vmem>>, vector<1x2x128xf32>,
    } else {
    }
    return
  }
  func.func @transform_0(%arg0: i32, %arg1: i32) -> (i32, i32, i32) {
    %c0_i32 = arith.constant 0 : i32
    %c0_i32_0 = arith.constant 0 : i32
    %c0_i32_1 = arith.constant 0 : i32
    return %arg0, %c0_i32, %c0_i32_0 : i32, i32, i32
  }
  func.func @transform_1(%arg0: i32, %arg1: i32) -> (i32, i32) {
    %c0_i32 = arith.constant 0 : i32
    %c0_i32_0 = arith.constant 0 : i32
    %c0_i32_1 = arith.constant 0 : i32
    return %c0_i32, %c0_i32_0 : i32, i32
  }
  func.func @transform_2(%arg0: i32, %arg1: i32) -> (i32, i32) {
    %c0_i32 = arith.constant 0 : i32
    %c0_i32_0 = arith.constant 0 : i32
    %c0_i32_1 = arith.constant 0 : i32
    return %c0_i32, %c0_i32_0 : i32, i32
  }
  func.func @transform_3(%arg0: i32, %arg1: i32) -> (i32, i32) {
    %c0_i32 = arith.constant 0 : i32
    %c0_i32_0 = arith.constant 0 : i32
    %c0_i32_1 = arith.constant 0 : i32
    return %c0_i32, %c0_i32_0 : i32, i32
  }
  func.func @transform_4(%arg0: i32, %arg1: i32) -> (i32, i32, i32) {
    %c0_i32 = arith.constant 0 : i32
    %c0_i32_0 = arith.constant 0 : i32
    %c0_i32_1 = arith.constant 0 : i32
    return %arg1, %c0_i32, %c0_i32_0 : i32, i32, i32
  }
  func.func @transform_5(%arg0: i32, %arg1: i32) -> (i32, i32, i32) {
    %c0_i32 = arith.constant 0 : i32
    %c0_i32_0 = arith.constant 0 : i32
    %c0_i32_1 = arith.constant 0 : i32
    return %arg1, %c0_i32, %c0_i32_0 : i32, i32, i32
  }
  func.func @transform_6(%arg0: i32, %arg1: i32) -> (i32, i32, i32) {
    %c0_i32 = arith.constant 0 : i32
    %c0_i32_0 = arith.constant 0 : i32
    %c0_i32_1 = arith.constant 0 : i32
    return %arg1, %c0_i32, %c0_i32_0 : i32, i32, i32
  }
  func.func @transform_7(%arg0: i32, %arg1: i32) -> (i32, i32, i32) {
    %c0_i32 = arith.constant 0 : i32
    %c0_i32_0 = arith.constant 0 : i32
    %c0_i32_1 = arith.constant 0 : i32
    return %arg1, %c0_i32, %c0_i32_0 : i32, i32, i32
  }
  func.func @transform_8(%arg0: i32, %arg1: i32) -> (i32, i32, i32) {
    %c0_i32 = arith.constant 0 : i32
    %c0_i32_0 = arith.constant 0 : i32
    %c0_i32_1 = arith.constant 0 : i32
    return %arg1, %c0_i32, %c0_i32_0 : i32, i32, i32
  }
  func.func @transform_9(%arg0: i32, %arg1: i32) -> (i32, i32, i32) {
    %c0_i32 = arith.constant 0 : i32
    %c0_i32_0 = arith.constant 0 : i32
    %c0_i32_1 = arith.constant 0 : i32
    return %arg1, %c0_i32, %c0_i32_0 : i32, i32, i32
  }
  func.func @transform_10(%arg0: i32, %arg1: i32) -> (i32, i32, i32) {
    %c0_i32 = arith.constant 0 : i32
    %c0_i32_0 = arith.constant 0 : i32
    %c0_i32_1 = arith.constant 0 : i32
    return %arg1, %c0_i32, %c0_i32_0 : i32, i32, i32
  }
  func.func @transform_11(%arg0: i32, %arg1: i32) -> (i32, i32, i32) {
    %c0_i32 = arith.constant 0 : i32
    %c0_i32_0 = arith.constant 0 : i32
    %c0_i32_1 = arith.constant 0 : i32
    return %arg1, %c0_i32, %c0_i32_0 : i32, i32, i32
  }
  func.func @transform_12(%arg0: i32, %arg1: i32) -> (i32, i32, i32) {
    %c0_i32 = arith.constant 0 : i32
    %c0_i32_0 = arith.constant 0 : i32
    %c0_i32_1 = arith.constant 0 : i32
    return %arg1, %c0_i32, %c0_i32_0 : i32, i32, i32
  }
  func.func @transform_13(%arg0: i32, %arg1: i32) -> (i32, i32, i32) {
    %c0_i32 = arith.constant 0 : i32
    %c0_i32_0 = arith.constant 0 : i32
    %c0_i32_1 = arith.constant 0 : i32
    return %arg1, %c0_i32, %c0_i32_0 : i32, i32, i32
  }
  func.func @transform_14(%arg0: i32, %arg1: i32) -> (i32, i32, i32) {
    %c0_i32 = arith.constant 0 : i32
    %c0_i32_0 = arith.constant 0 : i32
    %c0_i32_1 = arith.constant 0 : i32
    return %arg1, %c0_i32, %c0_i32_0 : i32, i32, i32
  }
  func.func @transform_15(%arg0: i32, %arg1: i32) -> (i32, i32, i32) {
    %c0_i32 = arith.constant 0 : i32
    %c0_i32_0 = arith.constant 0 : i32
    %c0_i32_1 = arith.constant 0 : i32
    return %arg1, %c0_i32, %c0_i32_0 : i32, i32, i32
  }
  func.func @transform_16(%arg0: i32, %arg1: i32) -> (i32, i32) {
    %c0_i32 = arith.constant 0 : i32
    %c0_i32_0 = arith.constant 0 : i32
    %c0_i32_1 = arith.constant 0 : i32
    return %c0_i32, %c0_i32_0 : i32, i32
  }
  func.func @transform_17(%arg0: i32, %arg1: i32) -> (i32, i32) {
    %c0_i32 = arith.constant 0 : i32
    %c0_i32_0 = arith.constant 0 : i32
    %c0_i32_1 = arith.constant 0 : i32
    return %c0_i32, %c0_i32_0 : i32, i32
  }
  func.func @transform_18(%arg0: i32, %arg1: i32) -> (i32, i32) {
    %c0_i32 = arith.constant 0 : i32
    %c0_i32_0 = arith.constant 0 : i32
    %c0_i32_1 = arith.constant 0 : i32
    return %c0_i32, %c0_i32_0 : i32, i32
  }
  func.func @transform_19(%arg0: i32, %arg1: i32) -> (i32, i32) {
    %c0_i32 = arith.constant 0 : i32
    %c0_i32_0 = arith.constant 0 : i32
    %c0_i32_1 = arith.constant 0 : i32
    return %c0_i32, %c0_i32_0 : i32, i32
  }
  func.func @transform_20(%arg0: i32, %arg1: i32) -> (i32, i32, i32) {
    %c0_i32 = arith.constant 0 : i32
    %c0_i32_0 = arith.constant 0 : i32
    %c0_i32_1 = arith.constant 0 : i32
    return %arg0, %c0_i32, %c0_i32_0 : i32, i32, i32
  }
}

</mosaic_0001>

<llo_original>
// kernel: tpu_custom_call.1
$region0: #{tpu_custom_call.1}
  #allocation0 [shape = 'u32[]', space=smem, size = 0x4, offset = 0x4, fixed_abs, tag = 'smem constant byte address 0x4 - core index']
  #allocation1 [shape = 'u32[72,128]{1,0:T(1,128)}', space=vmem, size = 0x9000, scoped, tag = 'internal scratch']
  #allocation2 [shape = 'f32[2,8,128]{2,1,0:T(8,128)}', space=vmem, size = 0x2000, scoped, tag = 'scratch operand']
  #allocation3 [shape = 'f32[1,1]{1,0:T(1,128)S(1)}', space=vmem, size = 0x200, scoped, tag = 'scoped memory for tpu_custom_call.1']
  %s0 = inlined_call_operand.vmem [shape: f32[4,8,128], index: 0, kind: input, shape index: {}]
  %s1 = inlined_call_operand.vmem [shape: f32[8,128], index: 1, kind: input, shape index: {}]
  %s2 = inlined_call_operand.vmem [shape: f32[128,128], index: 2, kind: input, shape index: {}]
  %s3 = inlined_call_operand.vmem [shape: f32[1,128], index: 3, kind: input, shape index: {}]
  %s4 = inlined_call_operand.hbm [shape: f32[2,128,384], index: 4, kind: input, shape index: {}]
  %s5 = inlined_call_operand.vmem [shape: f32[2,1,384], index: 5, kind: input, shape index: {}]
  %s6 = inlined_call_operand.hbm [shape: f32[2,128,128], index: 6, kind: input, shape index: {}]
  %s7 = inlined_call_operand.vmem [shape: f32[2,1,128], index: 7, kind: input, shape index: {}]
  %s8 = inlined_call_operand.vmem [shape: f32[2,1,128], index: 8, kind: input, shape index: {}]
  %s9 = inlined_call_operand.vmem [shape: f32[2,1,128], index: 9, kind: input, shape index: {}]
  %s10 = inlined_call_operand.hbm [shape: f32[2,128,256], index: 10, kind: input, shape index: {}]
  %s11 = inlined_call_operand.vmem [shape: f32[2,1,256], index: 11, kind: input, shape index: {}]
  %s12 = inlined_call_operand.hbm [shape: f32[2,256,128], index: 12, kind: input, shape index: {}]
  %s13 = inlined_call_operand.vmem [shape: f32[2,1,128], index: 13, kind: input, shape index: {}]
  %s14 = inlined_call_operand.vmem [shape: f32[2,1,128], index: 14, kind: input, shape index: {}]
  %s15 = inlined_call_operand.vmem [shape: f32[2,1,128], index: 15, kind: input, shape index: {}]
  %s16 = inlined_call_operand.vmem [shape: f32[128,64], index: 16, kind: input, shape index: {}]
  %s17 = inlined_call_operand.vmem [shape: f32[1,64], index: 17, kind: input, shape index: {}]
  %s18 = inlined_call_operand.vmem [shape: f32[64,1], index: 18, kind: input, shape index: {}]
  %s19 = inlined_call_operand.<no memory space> [shape: f32[1,1], index: 19, kind: input, shape index: {}]
  %s20 = inlined_call_operand.hbm [shape: f32[2,2,128], index: 20, kind: output, shape index: {}]
  %s21 = sld [smem:[#allocation0]]
  $region137: #{tpu_custom_call.1} parent=0
    _
  %s23 = ssub.s32 1, %s21
  %s24 = scalar_select 0, %s23, %s21
  %v25 = vstv %s19
  %26 = vst [vmem:[#allocation3] sm:$0x1] %v25
  $region1: #{tpu_custom_call.1} parent=0
    #allocation4 [shape = 'u8[393216]{0}', space=vmem, size = 0x60000, scoped, tag = 'input window, operand 4']
    #allocation5 [shape = 's32[2]{0}', space=sflag, size = 0x8, scoped, tag = 'scoped memory for tpu_custom_call.1']
    #allocation6 [shape = 's32[2]{0}', space=sflag, size = 0x8, scoped, tag = 'scoped memory for tpu_custom_call.1']
    #allocation7 [shape = 'u8[131072]{0}', space=vmem, size = 0x20000, scoped, tag = 'input window, operand 6']
    #allocation8 [shape = 's32[2]{0}', space=sflag, size = 0x8, scoped, tag = 'scoped memory for tpu_custom_call.1']
    #allocation9 [shape = 'u8[262144]{0}', space=vmem, size = 0x40000, scoped, tag = 'input window, operand 10']
    #allocation10 [shape = 'u8[262144]{0}', space=vmem, size = 0x40000, scoped, tag = 'input window, operand 12']
    #allocation11 [shape = 's32[2]{0}', space=sflag, size = 0x8, scoped, tag = 'scoped memory for tpu_custom_call.1']
    #allocation12 [shape = 'u8[2048]{0}', space=vmem, size = 0x800, scoped, tag = 'output window, operand 0']
    %27 = vsyncpa [#allocation5], 0
    %s28 = scalar_lea.sflag [#allocation5], 1
    %29 = vsyncpa %s28, 0
    %30 = vsyncpa [#allocation8], 0
    %s31 = scalar_lea.sflag [#allocation8], 1
    %32 = vsyncpa %s31, 0
    %33 = vsyncpa [#allocation11], 0
    %s34 = scalar_lea.sflag [#allocation11], 1
    %35 = vsyncpa %s34, 0
    %36 = vsyncpa [#allocation6], 0
    %s37 = scalar_lea.sflag [#allocation6], 1
    %38 = vsyncpa %s37, 0
    loop: start=0, step=1, limit=6
    $region2: #{tpu_custom_call.1} parent=1 // loop_pre_header
      _
    $region3: #{tpu_custom_call.1} parent=1 // loop_header
      %s40 = sphi 0, %s44
      %p41 = scmp.ge.s32.totalorder %s40, 6
      %s47 = sphi 0, %s59
      %s48 = sphi 0, %s55
      %s49 = sphi 0, %s47
      %s50 = sphi 0, %s48
      %s51 = sphi 0, %s49
      %s52 = sphi 0, %s50
      %s62 = sphi 0, %s64
      %s65 = sphi 0, %s62
      %s66 = sphi 0, %s65
      %s82 = sphi 0, %s66
      %s86 = sphi 0, %s86
      %s88 = sphi 0, %s86
      %s89 = sphi 0, %s88
      %s103 = sphi 0, %s89
      %s107 = sphi 0, %s107
      %s109 = sphi 0, %s107
      %s110 = sphi 0, %s109
      %s124 = sphi 0, %s110
      %s128 = sphi 0, %s128
      %s130 = sphi 0, %s128
      %s131 = sphi 0, %s130
      %s145 = sphi 0, %s131
      %s151 = sphi 0, %s153
      %s154 = sphi 0, %s151
      %s155 = sphi 0, %s154
      %s171 = sphi 0, %s155
      %s177 = sphi 0, %s179
      %s180 = sphi 0, %s177
      %s181 = sphi 0, %s180
      %s197 = sphi 0, %s181
      %s203 = sphi 0, %s205
      %s206 = sphi 0, %s203
      %s207 = sphi 0, %s206
      %s223 = sphi 0, %s207
      %s229 = sphi 0, %s231
      %s232 = sphi 0, %s229
      %s233 = sphi 0, %s232
      %s249 = sphi 0, %s233
      %s255 = sphi 0, %s257
      %s258 = sphi 0, %s255
      %s259 = sphi 0, %s258
      %s275 = sphi 0, %s259
      %s281 = sphi 0, %s283
      %s284 = sphi 0, %s281
      %s285 = sphi 0, %s284
      %s301 = sphi 0, %s285
      %s307 = sphi 0, %s309
      %s310 = sphi 0, %s307
      %s311 = sphi 0, %s310
      %s327 = sphi 0, %s311
      %s333 = sphi 0, %s335
      %s336 = sphi 0, %s333
      %s337 = sphi 0, %s336
      %s353 = sphi 0, %s337
      %s359 = sphi 0, %s361
      %s362 = sphi 0, %s359
      %s363 = sphi 0, %s362
      %s379 = sphi 0, %s363
      %s385 = sphi 0, %s387
      %s388 = sphi 0, %s385
      %s389 = sphi 0, %s388
      %s405 = sphi 0, %s389
      %s411 = sphi 0, %s413
      %s414 = sphi 0, %s411
      %s415 = sphi 0, %s414
      %s431 = sphi 0, %s415
      %s437 = sphi 0, %s439
      %s440 = sphi 0, %s437
      %s441 = sphi 0, %s440
      %s457 = sphi 0, %s441
      %s461 = sphi 0, %s461
      %s463 = sphi 0, %s461
      %s464 = sphi 0, %s463
      %s478 = sphi 0, %s464
      %s482 = sphi 0, %s482
      %s484 = sphi 0, %s482
      %s485 = sphi 0, %s484
      %s499 = sphi 0, %s485
      %s503 = sphi 0, %s503
      %s505 = sphi 0, %s503
      %s506 = sphi 0, %s505
      %s520 = sphi 0, %s506
      %s524 = sphi 0, %s524
      %s526 = sphi 0, %s524
      %s527 = sphi 0, %s526
      %s541 = sphi 0, %s527
      %s547 = sphi 0, %s549
      %s550 = sphi 0, %s547
      %s551 = sphi 0, %s550
      %s567 = sphi 0, %s551
    $region4: #{tpu_custom_call.1} parent=1 // loop_header_branch
      %43 = sbr.rel (%p41) target = $region8
    $region5: #{tpu_custom_call.1} parent=1 // loop_body
      %s45 = ssub.s32 %s40, 1
      %s46 = ssub.s32 %s40, 2
      %s53 = sadd.s32 1, %s48
      %p54 = scmp.ge.s32.totalorder %s53, 2
      %s55 = scalar_select %p54, 0, %s53
      %s56 = sadd.s32 1, %s47
      %s57 = scalar_select %p54, %s56, %s47
      %p58 = scmp.ge.s32.totalorder %s57, 2
      %s59 = scalar_select %p58, 0, %s57
      %s60 = ssub.s32 %s47, %s59
      %p61 = scmp.eq.s32.totalorder %s60, 0
      %s63 = sadd.s32 %s62, 1
      %s64 = scalar_select %p61, %s62, %s63
      %p67 = pneg %p61
      %p68 = scmp.eq.s32.totalorder %s40, 3
      %p69 = por %p67, %p68
      %p70 = scmp.ne.s32.totalorder %s62, %s65
      %p71 = scmp.eq.s32.totalorder %s40, 0
      %p72 = por %p70, %p71
      %p73 = scmp.ne.s32.totalorder %s62, %s65
      %p74 = scmp.eq.s32.totalorder %s45, 3
      %p75 = por %p73, %p74
      %p76 = scmp.ne.s32.totalorder %s65, %s66
      %p77 = scmp.eq.s32.totalorder %s45, 0
      %p78 = por %p76, %p77
      %p79 = scmp.ne.s32.totalorder %s65, %s66
      %p80 = scmp.eq.s32.totalorder %s46, 3
      %p81 = por %p79, %p80
      %p83 = scmp.ne.s32.totalorder %s66, %s82
      %p84 = scmp.eq.s32.totalorder %s46, 0
      %p85 = por %p83, %p84
      %s87 = sadd.s32 %s86, 1
      %p90 = scmp.eq.s32.totalorder %s40, 3
      %p91 = scmp.ne.s32.totalorder %s86, %s88
      %p92 = scmp.eq.s32.totalorder %s40, 0
      %p93 = por %p91, %p92
      %p94 = scmp.ne.s32.totalorder %s86, %s88
      %p95 = scmp.eq.s32.totalorder %s45, 3
      %p96 = por %p94, %p95
      %p97 = scmp.ne.s32.totalorder %s88, %s89
      %p98 = scmp.eq.s32.totalorder %s45, 0
      %p99 = por %p97, %p98
      %p100 = scmp.ne.s32.totalorder %s88, %s89
      %p101 = scmp.eq.s32.totalorder %s46, 3
      %p102 = por %p100, %p101
      %p104 = scmp.ne.s32.totalorder %s89, %s103
      %p105 = scmp.eq.s32.totalorder %s46, 0
      %p106 = por %p104, %p105
      %s108 = sadd.s32 %s107, 1
      %p111 = scmp.eq.s32.totalorder %s40, 3
      %p112 = scmp.ne.s32.totalorder %s107, %s109
      %p113 = scmp.eq.s32.totalorder %s40, 0
      %p114 = por %p112, %p113
      %p115 = scmp.ne.s32.totalorder %s107, %s109
      %p116 = scmp.eq.s32.totalorder %s45, 3
      %p117 = por %p115, %p116
      %p118 = scmp.ne.s32.totalorder %s109, %s110
      %p119 = scmp.eq.s32.totalorder %s45, 0
      %p120 = por %p118, %p119
      %p121 = scmp.ne.s32.totalorder %s109, %s110
      %p122 = scmp.eq.s32.totalorder %s46, 3
      %p123 = por %p121, %p122
      %p125 = scmp.ne.s32.totalorder %s110, %s124
      %p126 = scmp.eq.s32.totalorder %s46, 0
      %p127 = por %p125, %p126
      %s129 = sadd.s32 %s128, 1
      %p132 = scmp.eq.s32.totalorder %s40, 3
      %p133 = scmp.ne.s32.totalorder %s128, %s130
      %p134 = scmp.eq.s32.totalorder %s40, 0
      %p135 = por %p133, %p134
      %p136 = scmp.ne.s32.totalorder %s128, %s130
      %p137 = scmp.eq.s32.totalorder %s45, 3
      %p138 = por %p136, %p137
      %p139 = scmp.ne.s32.totalorder %s130, %s131
      %p140 = scmp.eq.s32.totalorder %s45, 0
      %p141 = por %p139, %p140
      %p142 = scmp.ne.s32.totalorder %s130, %s131
      %p143 = scmp.eq.s32.totalorder %s46, 3
      %p144 = por %p142, %p143
      %p146 = scmp.ne.s32.totalorder %s131, %s145
      %p147 = scmp.eq.s32.totalorder %s46, 0
      %p148 = por %p146, %p147
      %s149 = ssub.s32 %s48, %s55
      %p150 = scmp.eq.s32.totalorder %s149, 0
      %s152 = sadd.s32 %s151, 1
      %s153 = scalar_select %p150, %s151, %s152
      %p156 = pneg %p150
      %p157 = scmp.eq.s32.totalorder %s40, 3
      %p158 = por %p156, %p157
      %p159 = scmp.ne.s32.totalorder %s151, %s154
      %p160 = scmp.eq.s32.totalorder %s40, 0
      %p161 = por %p159, %p160
      %p162 = scmp.ne.s32.totalorder %s151, %s154
      %p163 = scmp.eq.s32.totalorder %s45, 3
      %p164 = por %p162, %p163
      %p165 = scmp.ne.s32.totalorder %s154, %s155
      %p166 = scmp.eq.s32.totalorder %s45, 0
      %p167 = por %p165, %p166
      %p168 = scmp.ne.s32.totalorder %s154, %s155
      %p169 = scmp.eq.s32.totalorder %s46, 3
      %p170 = por %p168, %p169
      %p172 = scmp.ne.s32.totalorder %s155, %s171
      %p173 = scmp.eq.s32.totalorder %s46, 0
      %p174 = por %p172, %p173
      %s175 = ssub.s32 %s48, %s55
      %p176 = scmp.eq.s32.totalorder %s175, 0
      %s178 = sadd.s32 %s177, 1
      %s179 = scalar_select %p176, %s177, %s178
      %p182 = pneg %p176
      %p183 = scmp.eq.s32.totalorder %s40, 3
      %p184 = por %p182, %p183
      %p185 = scmp.ne.s32.totalorder %s177, %s180
      %p186 = scmp.eq.s32.totalorder %s40, 0
      %p187 = por %p185, %p186
      %p188 = scmp.ne.s32.totalorder %s177, %s180
      %p189 = scmp.eq.s32.totalorder %s45, 3
      %p190 = por %p188, %p189
      %p191 = scmp.ne.s32.totalorder %s180, %s181
      %p192 = scmp.eq.s32.totalorder %s45, 0
      %p193 = por %p191, %p192
      %p194 = scmp.ne.s32.totalorder %s180, %s181
      %p195 = scmp.eq.s32.totalorder %s46, 3
      %p196 = por %p194, %p195
      %p198 = scmp.ne.s32.totalorder %s181, %s197
      %p199 = scmp.eq.s32.totalorder %s46, 0
      %p200 = por %p198, %p199
      %s201 = ssub.s32 %s48, %s55
      %p202 = scmp.eq.s32.totalorder %s201, 0
      %s204 = sadd.s32 %s203, 1
      %s205 = scalar_select %p202, %s203, %s204
      %p208 = pneg %p202
      %p209 = scmp.eq.s32.totalorder %s40, 3
      %p210 = por %p208, %p209
      %p211 = scmp.ne.s32.totalorder %s203, %s206
      %p212 = scmp.eq.s32.totalorder %s40, 0
      %p213 = por %p211, %p212
      %p214 = scmp.ne.s32.totalorder %s203, %s206
      %p215 = scmp.eq.s32.totalorder %s45, 3
      %p216 = por %p214, %p215
      %p217 = scmp.ne.s32.totalorder %s206, %s207
      %p218 = scmp.eq.s32.totalorder %s45, 0
      %p219 = por %p217, %p218
      %p220 = scmp.ne.s32.totalorder %s206, %s207
      %p221 = scmp.eq.s32.totalorder %s46, 3
      %p222 = por %p220, %p221
      %p224 = scmp.ne.s32.totalorder %s207, %s223
      %p225 = scmp.eq.s32.totalorder %s46, 0
      %p226 = por %p224, %p225
      %s227 = ssub.s32 %s48, %s55
      %p228 = scmp.eq.s32.totalorder %s227, 0
      %s230 = sadd.s32 %s229, 1
      %s231 = scalar_select %p228, %s229, %s230
      %p234 = pneg %p228
      %p235 = scmp.eq.s32.totalorder %s40, 3
      %p236 = por %p234, %p235
      %p237 = scmp.ne.s32.totalorder %s229, %s232
      %p238 = scmp.eq.s32.totalorder %s40, 0
      %p239 = por %p237, %p238
      %p240 = scmp.ne.s32.totalorder %s229, %s232
      %p241 = scmp.eq.s32.totalorder %s45, 3
      %p242 = por %p240, %p241
      %p243 = scmp.ne.s32.totalorder %s232, %s233
      %p244 = scmp.eq.s32.totalorder %s45, 0
      %p245 = por %p243, %p244
      %p246 = scmp.ne.s32.totalorder %s232, %s233
      %p247 = scmp.eq.s32.totalorder %s46, 3
      %p248 = por %p246, %p247
      %p250 = scmp.ne.s32.totalorder %s233, %s249
      %p251 = scmp.eq.s32.totalorder %s46, 0
      %p252 = por %p250, %p251
      %s253 = ssub.s32 %s48, %s55
      %p254 = scmp.eq.s32.totalorder %s253, 0
      %s256 = sadd.s32 %s255, 1
      %s257 = scalar_select %p254, %s255, %s256
      %p260 = pneg %p254
      %p261 = scmp.eq.s32.totalorder %s40, 3
      %p262 = por %p260, %p261
      %p263 = scmp.ne.s32.totalorder %s255, %s258
      %p264 = scmp.eq.s32.totalorder %s40, 0
      %p265 = por %p263, %p264
      %p266 = scmp.ne.s32.totalorder %s255, %s258
      %p267 = scmp.eq.s32.totalorder %s45, 3
      %p268 = por %p266, %p267
      %p269 = scmp.ne.s32.totalorder %s258, %s259
      %p270 = scmp.eq.s32.totalorder %s45, 0
      %p271 = por %p269, %p270
      %p272 = scmp.ne.s32.totalorder %s258, %s259
      %p273 = scmp.eq.s32.totalorder %s46, 3
      %p274 = por %p272, %p273
      %p276 = scmp.ne.s32.totalorder %s259, %s275
      %p277 = scmp.eq.s32.totalorder %s46, 0
      %p278 = por %p276, %p277
      %s279 = ssub.s32 %s48, %s55
      %p280 = scmp.eq.s32.totalorder %s279, 0
      %s282 = sadd.s32 %s281, 1
      %s283 = scalar_select %p280, %s281, %s282
      %p286 = pneg %p280
      %p287 = scmp.eq.s32.totalorder %s40, 3
      %p288 = por %p286, %p287
      %p289 = scmp.ne.s32.totalorder %s281, %s284
      %p290 = scmp.eq.s32.totalorder %s40, 0
      %p291 = por %p289, %p290
      %p292 = scmp.ne.s32.totalorder %s281, %s284
      %p293 = scmp.eq.s32.totalorder %s45, 3
      %p294 = por %p292, %p293
      %p295 = scmp.ne.s32.totalorder %s284, %s285
      %p296 = scmp.eq.s32.totalorder %s45, 0
      %p297 = por %p295, %p296
      %p298 = scmp.ne.s32.totalorder %s284, %s285
      %p299 = scmp.eq.s32.totalorder %s46, 3
      %p300 = por %p298, %p299
      %p302 = scmp.ne.s32.totalorder %s285, %s301
      %p303 = scmp.eq.s32.totalorder %s46, 0
      %p304 = por %p302, %p303
      %s305 = ssub.s32 %s48, %s55
      %p306 = scmp.eq.s32.totalorder %s305, 0
      %s308 = sadd.s32 %s307, 1
      %s309 = scalar_select %p306, %s307, %s308
      %p312 = pneg %p306
      %p313 = scmp.eq.s32.totalorder %s40, 3
      %p314 = por %p312, %p313
      %p315 = scmp.ne.s32.totalorder %s307, %s310
      %p316 = scmp.eq.s32.totalorder %s40, 0
      %p317 = por %p315, %p316
      %p318 = scmp.ne.s32.totalorder %s307, %s310
      %p319 = scmp.eq.s32.totalorder %s45, 3
      %p320 = por %p318, %p319
      %p321 = scmp.ne.s32.totalorder %s310, %s311
      %p322 = scmp.eq.s32.totalorder %s45, 0
      %p323 = por %p321, %p322
      %p324 = scmp.ne.s32.totalorder %s310, %s311
      %p325 = scmp.eq.s32.totalorder %s46, 3
      %p326 = por %p324, %p325
      %p328 = scmp.ne.s32.totalorder %s311, %s327
      %p329 = scmp.eq.s32.totalorder %s46, 0
      %p330 = por %p328, %p329
      %s331 = ssub.s32 %s48, %s55
      %p332 = scmp.eq.s32.totalorder %s331, 0
      %s334 = sadd.s32 %s333, 1
      %s335 = scalar_select %p332, %s333, %s334
      %p338 = pneg %p332
      %p339 = scmp.eq.s32.totalorder %s40, 3
      %p340 = por %p338, %p339
      %p341 = scmp.ne.s32.totalorder %s333, %s336
      %p342 = scmp.eq.s32.totalorder %s40, 0
      %p343 = por %p341, %p342
      %p344 = scmp.ne.s32.totalorder %s333, %s336
      %p345 = scmp.eq.s32.totalorder %s45, 3
      %p346 = por %p344, %p345
      %p347 = scmp.ne.s32.totalorder %s336, %s337
      %p348 = scmp.eq.s32.totalorder %s45, 0
      %p349 = por %p347, %p348
      %p350 = scmp.ne.s32.totalorder %s336, %s337
      %p351 = scmp.eq.s32.totalorder %s46, 3
      %p352 = por %p350, %p351
      %p354 = scmp.ne.s32.totalorder %s337, %s353
      %p355 = scmp.eq.s32.totalorder %s46, 0
      %p356 = por %p354, %p355
      %s357 = ssub.s32 %s48, %s55
      %p358 = scmp.eq.s32.totalorder %s357, 0
      %s360 = sadd.s32 %s359, 1
      %s361 = scalar_select %p358, %s359, %s360
      %p364 = pneg %p358
      %p365 = scmp.eq.s32.totalorder %s40, 3
      %p366 = por %p364, %p365
      %p367 = scmp.ne.s32.totalorder %s359, %s362
      %p368 = scmp.eq.s32.totalorder %s40, 0
      %p369 = por %p367, %p368
      %p370 = scmp.ne.s32.totalorder %s359, %s362
      %p371 = scmp.eq.s32.totalorder %s45, 3
      %p372 = por %p370, %p371
      %p373 = scmp.ne.s32.totalorder %s362, %s363
      %p374 = scmp.eq.s32.totalorder %s45, 0
      %p375 = por %p373, %p374
      %p376 = scmp.ne.s32.totalorder %s362, %s363
      %p377 = scmp.eq.s32.totalorder %s46, 3
      %p378 = por %p376, %p377
      %p380 = scmp.ne.s32.totalorder %s363, %s379
      %p381 = scmp.eq.s32.totalorder %s46, 0
      %p382 = por %p380, %p381
      %s383 = ssub.s32 %s48, %s55
      %p384 = scmp.eq.s32.totalorder %s383, 0
      %s386 = sadd.s32 %s385, 1
      %s387 = scalar_select %p384, %s385, %s386
      %p390 = pneg %p384
      %p391 = scmp.eq.s32.totalorder %s40, 3
      %p392 = por %p390, %p391
      %p393 = scmp.ne.s32.totalorder %s385, %s388
      %p394 = scmp.eq.s32.totalorder %s40, 0
      %p395 = por %p393, %p394
      %p396 = scmp.ne.s32.totalorder %s385, %s388
      %p397 = scmp.eq.s32.totalorder %s45, 3
      %p398 = por %p396, %p397
      %p399 = scmp.ne.s32.totalorder %s388, %s389
      %p400 = scmp.eq.s32.totalorder %s45, 0
      %p401 = por %p399, %p400
      %p402 = scmp.ne.s32.totalorder %s388, %s389
      %p403 = scmp.eq.s32.totalorder %s46, 3
      %p404 = por %p402, %p403
      %p406 = scmp.ne.s32.totalorder %s389, %s405
      %p407 = scmp.eq.s32.totalorder %s46, 0
      %p408 = por %p406, %p407
      %s409 = ssub.s32 %s48, %s55
      %p410 = scmp.eq.s32.totalorder %s409, 0
      %s412 = sadd.s32 %s411, 1
      %s413 = scalar_select %p410, %s411, %s412
      %p416 = pneg %p410
      %p417 = scmp.eq.s32.totalorder %s40, 3
      %p418 = por %p416, %p417
      %p419 = scmp.ne.s32.totalorder %s411, %s414
      %p420 = scmp.eq.s32.totalorder %s40, 0
      %p421 = por %p419, %p420
      %p422 = scmp.ne.s32.totalorder %s411, %s414
      %p423 = scmp.eq.s32.totalorder %s45, 3
      %p424 = por %p422, %p423
      %p425 = scmp.ne.s32.totalorder %s414, %s415
      %p426 = scmp.eq.s32.totalorder %s45, 0
      %p427 = por %p425, %p426
      %p428 = scmp.ne.s32.totalorder %s414, %s415
      %p429 = scmp.eq.s32.totalorder %s46, 3
      %p430 = por %p428, %p429
      %p432 = scmp.ne.s32.totalorder %s415, %s431
      %p433 = scmp.eq.s32.totalorder %s46, 0
      %p434 = por %p432, %p433
      %s435 = ssub.s32 %s48, %s55
      %p436 = scmp.eq.s32.totalorder %s435, 0
      %s438 = sadd.s32 %s437, 1
      %s439 = scalar_select %p436, %s437, %s438
      %p442 = pneg %p436
      %p443 = scmp.eq.s32.totalorder %s40, 3
      %p444 = por %p442, %p443
      %p445 = scmp.ne.s32.totalorder %s437, %s440
      %p446 = scmp.eq.s32.totalorder %s40, 0
      %p447 = por %p445, %p446
      %p448 = scmp.ne.s32.totalorder %s437, %s440
      %p449 = scmp.eq.s32.totalorder %s45, 3
      %p450 = por %p448, %p449
      %p451 = scmp.ne.s32.totalorder %s440, %s441
      %p452 = scmp.eq.s32.totalorder %s45, 0
      %p453 = por %p451, %p452
      %p454 = scmp.ne.s32.totalorder %s440, %s441
      %p455 = scmp.eq.s32.totalorder %s46, 3
      %p456 = por %p454, %p455
      %p458 = scmp.ne.s32.totalorder %s441, %s457
      %p459 = scmp.eq.s32.totalorder %s46, 0
      %p460 = por %p458, %p459
      %s462 = sadd.s32 %s461, 1
      %p465 = scmp.eq.s32.totalorder %s40, 3
      %p466 = scmp.ne.s32.totalorder %s461, %s463
      %p467 = scmp.eq.s32.totalorder %s40, 0
      %p468 = por %p466, %p467
      %p469 = scmp.ne.s32.totalorder %s461, %s463
      %p470 = scmp.eq.s32.totalorder %s45, 3
      %p471 = por %p469, %p470
      %p472 = scmp.ne.s32.totalorder %s463, %s464
      %p473 = scmp.eq.s32.totalorder %s45, 0
      %p474 = por %p472, %p473
      %p475 = scmp.ne.s32.totalorder %s463, %s464
      %p476 = scmp.eq.s32.totalorder %s46, 3
      %p477 = por %p475, %p476
      %p479 = scmp.ne.s32.totalorder %s464, %s478
      %p480 = scmp.eq.s32.totalorder %s46, 0
      %p481 = por %p479, %p480
      %s483 = sadd.s32 %s482, 1
      %p486 = scmp.eq.s32.totalorder %s40, 3
      %p487 = scmp.ne.s32.totalorder %s482, %s484
      %p488 = scmp.eq.s32.totalorder %s40, 0
      %p489 = por %p487, %p488
      %p490 = scmp.ne.s32.totalorder %s482, %s484
      %p491 = scmp.eq.s32.totalorder %s45, 3
      %p492 = por %p490, %p491
      %p493 = scmp.ne.s32.totalorder %s484, %s485
      %p494 = scmp.eq.s32.totalorder %s45, 0
      %p495 = por %p493, %p494
      %p496 = scmp.ne.s32.totalorder %s484, %s485
      %p497 = scmp.eq.s32.totalorder %s46, 3
      %p498 = por %p496, %p497
      %p500 = scmp.ne.s32.totalorder %s485, %s499
      %p501 = scmp.eq.s32.totalorder %s46, 0
      %p502 = por %p500, %p501
      %s504 = sadd.s32 %s503, 1
      %p507 = scmp.eq.s32.totalorder %s40, 3
      %p508 = scmp.ne.s32.totalorder %s503, %s505
      %p509 = scmp.eq.s32.totalorder %s40, 0
      %p510 = por %p508, %p509
      %p511 = scmp.ne.s32.totalorder %s503, %s505
      %p512 = scmp.eq.s32.totalorder %s45, 3
      %p513 = por %p511, %p512
      %p514 = scmp.ne.s32.totalorder %s505, %s506
      %p515 = scmp.eq.s32.totalorder %s45, 0
      %p516 = por %p514, %p515
      %p517 = scmp.ne.s32.totalorder %s505, %s506
      %p518 = scmp.eq.s32.totalorder %s46, 3
      %p519 = por %p517, %p518
      %p521 = scmp.ne.s32.totalorder %s506, %s520
      %p522 = scmp.eq.s32.totalorder %s46, 0
      %p523 = por %p521, %p522
      %s525 = sadd.s32 %s524, 1
      %p528 = scmp.eq.s32.totalorder %s40, 3
      %p529 = scmp.ne.s32.totalorder %s524, %s526
      %p530 = scmp.eq.s32.totalorder %s40, 0
      %p531 = por %p529, %p530
      %p532 = scmp.ne.s32.totalorder %s524, %s526
      %p533 = scmp.eq.s32.totalorder %s45, 3
      %p534 = por %p532, %p533
      %p535 = scmp.ne.s32.totalorder %s526, %s527
      %p536 = scmp.eq.s32.totalorder %s45, 0
      %p537 = por %p535, %p536
      %p538 = scmp.ne.s32.totalorder %s526, %s527
      %p539 = scmp.eq.s32.totalorder %s46, 3
      %p540 = por %p538, %p539
      %p542 = scmp.ne.s32.totalorder %s527, %s541
      %p543 = scmp.eq.s32.totalorder %s46, 0
      %p544 = por %p542, %p543
      %s545 = ssub.s32 %s47, %s59
      %p546 = scmp.eq.s32.totalorder %s545, 0
      %s548 = sadd.s32 %s547, 1
      %s549 = scalar_select %p546, %s547, %s548
      %p552 = pneg %p546
      %p553 = scmp.eq.s32.totalorder %s40, 3
      %p554 = por %p552, %p553
      %p555 = scmp.ne.s32.totalorder %s547, %s550
      %p556 = scmp.eq.s32.totalorder %s40, 0
      %p557 = por %p555, %p556
      %p558 = scmp.ne.s32.totalorder %s547, %s550
      %p559 = scmp.eq.s32.totalorder %s45, 3
      %p560 = por %p558, %p559
      %p561 = scmp.ne.s32.totalorder %s550, %s551
      %p562 = scmp.eq.s32.totalorder %s45, 0
      %p563 = por %p561, %p562
      %p564 = scmp.ne.s32.totalorder %s550, %s551
      %p565 = scmp.eq.s32.totalorder %s46, 3
      %p566 = por %p564, %p565
      %p568 = scmp.ne.s32.totalorder %s551, %s567
      %p569 = scmp.eq.s32.totalorder %s46, 0
      %p570 = por %p568, %p569
      %p571 = scmp.le.s32.totalorder 1, %s40
      %p572 = scmp.lt.s32.totalorder %s40, 5
      %p573 = pnand %p571, %p572
      %p574 = pneg %p573
      // Predicated region
      $region9: #{tpu_custom_call.1} parent=5 // pred_check
        _
      $region10: #{tpu_custom_call.1} parent=5 // pred_check_branch
        %576 = sbr.rel (%p573) target = $region12
      $region11: #{tpu_custom_call.1} parent=5 // pred_region
        %s577 = ssub.s32 %s40, 1
        // Predicated region
        $region13: #{tpu_custom_call.1} parent=11 // pred_check
          %p578 = pneg %p99
        $region14: #{tpu_custom_call.1} parent=11 // pred_check_branch
          %580 = sbr.rel (%p578) target = $region16
        $region15: #{tpu_custom_call.1} parent=11 // pred_region
          _
        $region16: #{tpu_custom_call.1} parent=11 // pred_fallthru
          _
        // Predicated region
        $region17: #{tpu_custom_call.1} parent=11 // pred_check
          %p581 = pneg %p120
        $region18: #{tpu_custom_call.1} parent=11 // pred_check_branch
          %583 = sbr.rel (%p581) target = $region20
        $region19: #{tpu_custom_call.1} parent=11 // pred_region
          _
        $region20: #{tpu_custom_call.1} parent=11 // pred_fallthru
          _
        // Predicated region
        $region21: #{tpu_custom_call.1} parent=11 // pred_check
          %p584 = pneg %p141
        $region22: #{tpu_custom_call.1} parent=11 // pred_check_branch
          %586 = sbr.rel (%p584) target = $region24
        $region23: #{tpu_custom_call.1} parent=11 // pred_region
          _
        $region24: #{tpu_custom_call.1} parent=11 // pred_fallthru
          _
        // Predicated region
        $region25: #{tpu_custom_call.1} parent=11 // pred_check
          %p587 = pneg %p474
        $region26: #{tpu_custom_call.1} parent=11 // pred_check_branch
          %589 = sbr.rel (%p587) target = $region28
        $region27: #{tpu_custom_call.1} parent=11 // pred_region
          _
        $region28: #{tpu_custom_call.1} parent=11 // pred_fallthru
          _
        // Predicated region
        $region29: #{tpu_custom_call.1} parent=11 // pred_check
          %p590 = pneg %p495
        $region30: #{tpu_custom_call.1} parent=11 // pred_check_branch
          %592 = sbr.rel (%p590) target = $region32
        $region31: #{tpu_custom_call.1} parent=11 // pred_region
          _
        $region32: #{tpu_custom_call.1} parent=11 // pred_fallthru
          _
        // Predicated region
        $region33: #{tpu_custom_call.1} parent=11 // pred_check
          %p593 = pneg %p516
        $region34: #{tpu_custom_call.1} parent=11 // pred_check_branch
          %595 = sbr.rel (%p593) target = $region36
        $region35: #{tpu_custom_call.1} parent=11 // pred_region
          _
        $region36: #{tpu_custom_call.1} parent=11 // pred_fallthru
          _
        // Predicated region
        $region37: #{tpu_custom_call.1} parent=11 // pred_check
          %p596 = pneg %p537
        $region38: #{tpu_custom_call.1} parent=11 // pred_check_branch
          %598 = sbr.rel (%p596) target = $region40
        $region39: #{tpu_custom_call.1} parent=11 // pred_region
          _
        $region40: #{tpu_custom_call.1} parent=11 // pred_fallthru
          _
      $region12: #{tpu_custom_call.1} parent=5 // pred_fallthru
        _
      %p599 = scmp.lt.s32.totalorder %s40, 4
      // Predicated region
      $region41: #{tpu_custom_call.1} parent=5 // pred_check
        %p600 = pneg %p599
      $region42: #{tpu_custom_call.1} parent=5 // pred_check_branch
        %602 = sbr.rel (%p600) target = $region44
      $region43: #{tpu_custom_call.1} parent=5 // pred_region
        // Predicated region
        $region45: #{tpu_custom_call.1} parent=43 // pred_check
          %p603 = pneg %p72
        $region46: #{tpu_custom_call.1} parent=43 // pred_check_branch
          %605 = sbr.rel (%p603) target = $region48
        $region47: #{tpu_custom_call.1} parent=43 // pred_region
          %s606 = smul.u32 2, %s47
          %p607 = scmp.lt.s32.totalorder %s606, 3
          %s608 = scalar_select %p607, %s606, 3
          %s609 = smul.addr %s608, 8
          %s610 = scalar_lea.vmem %s0, %s609
          %s611 = smul.u32 2, %s47
        $region48: #{tpu_custom_call.1} parent=43 // pred_fallthru
          _
        // Predicated region
        $region49: #{tpu_custom_call.1} parent=43 // pred_check
          %p612 = pneg %p161
        $region50: #{tpu_custom_call.1} parent=43 // pred_check_branch
          %614 = sbr.rel (%p612) target = $region52
        $region51: #{tpu_custom_call.1} parent=43 // pred_region
          %s615 = sand.u32 %s151, 1
          %s616 = scalar_lea.sflag [#allocation5], %s615
          %s617 = sand.u32 %s151, 1
          %s618 = smul.addr %s617, 384
          %s619 = scalar_lea.vmem [#allocation4], %s618
          %621 = vsyncadd %s616, 0
          %s622 = smul.addr %s48, 48
          %s623 = smul.addr %s622, 8
          %s624 = scalar_lea.hbm %s4, %s623
          %s625 = sshll.u32 %s624, 4
          %s626 = int_to_ptr.hbm [resolvable:$true] %s625
          %s627 = sshll.u32 %s619, 4
          %s628 = int_to_ptr.vmem [resolvable:$true] %s627
          %633 = dma.hbm_to_vmem [thread:$0]  %s626, 6144, %s628, %s616, 384, 384, 24
        $region52: #{tpu_custom_call.1} parent=43 // pred_fallthru
          _
        // Predicated region
        $region53: #{tpu_custom_call.1} parent=43 // pred_check
          %p634 = pneg %p187
        $region54: #{tpu_custom_call.1} parent=43 // pred_check_branch
          %636 = sbr.rel (%p634) target = $region56
        $region55: #{tpu_custom_call.1} parent=43 // pred_region
          %p637 = scmp.lt.s32.totalorder %s48, 1
          %s638 = scalar_select %p637, %s48, 1
          %s639 = smul.addr %s638, 3
          %s640 = scalar_lea.vmem %s5, %s639
        $region56: #{tpu_custom_call.1} parent=43 // pred_fallthru
          _
        // Predicated region
        $region57: #{tpu_custom_call.1} parent=43 // pred_check
          %p641 = pneg %p213
        $region58: #{tpu_custom_call.1} parent=43 // pred_check_branch
          %643 = sbr.rel (%p641) target = $region60
        $region59: #{tpu_custom_call.1} parent=43 // pred_region
          %s644 = sand.u32 %s40, 1
          %s645 = scalar_lea.sflag [#allocation8], %s644
          %s646 = sand.u32 %s203, 1
          %s647 = smul.addr %s646, 128
          %s648 = scalar_lea.vmem [#allocation7], %s647
          %650 = vsyncadd %s645, 0
          %s651 = smul.addr %s48, 16
          %s652 = smul.addr %s651, 8
          %s653 = scalar_lea.hbm %s6, %s652
          %s654 = sshll.u32 %s653, 4
          %s655 = int_to_ptr.hbm [resolvable:$true] %s654
          %s656 = sshll.u32 %s648, 4
          %s657 = int_to_ptr.vmem [resolvable:$true] %s656
          %662 = dma.hbm_to_vmem [thread:$0]  %s655, 2048, %s657, %s645, 128, 128, 8
        $region60: #{tpu_custom_call.1} parent=43 // pred_fallthru
          _
        // Predicated region
        $region61: #{tpu_custom_call.1} parent=43 // pred_check
          %p663 = pneg %p239
        $region62: #{tpu_custom_call.1} parent=43 // pred_check_branch
          %665 = sbr.rel (%p663) target = $region64
        $region63: #{tpu_custom_call.1} parent=43 // pred_region
          %p666 = scmp.lt.s32.totalorder %s48, 1
          %s667 = scalar_select %p666, %s48, 1
          %s668 = scalar_lea.vmem %s7, %s667
        $region64: #{tpu_custom_call.1} parent=43 // pred_fallthru
          _
        // Predicated region
        $region65: #{tpu_custom_call.1} parent=43 // pred_check
          %p669 = pneg %p265
        $region66: #{tpu_custom_call.1} parent=43 // pred_check_branch
          %671 = sbr.rel (%p669) target = $region68
        $region67: #{tpu_custom_call.1} parent=43 // pred_region
          %p672 = scmp.lt.s32.totalorder %s48, 1
          %s673 = scalar_select %p672, %s48, 1
          %s674 = scalar_lea.vmem %s8, %s673
        $region68: #{tpu_custom_call.1} parent=43 // pred_fallthru
          _
        // Predicated region
        $region69: #{tpu_custom_call.1} parent=43 // pred_check
          %p675 = pneg %p291
        $region70: #{tpu_custom_call.1} parent=43 // pred_check_branch
          %677 = sbr.rel (%p675) target = $region72
        $region71: #{tpu_custom_call.1} parent=43 // pred_region
          %p678 = scmp.lt.s32.totalorder %s48, 1
          %s679 = scalar_select %p678, %s48, 1
          %s680 = scalar_lea.vmem %s9, %s679
        $region72: #{tpu_custom_call.1} parent=43 // pred_fallthru
          _
        // Predicated region
        $region73: #{tpu_custom_call.1} parent=43 // pred_check
          %p681 = pneg %p317
        $region74: #{tpu_custom_call.1} parent=43 // pred_check_branch
          %683 = sbr.rel (%p681) target = $region76
        $region75: #{tpu_custom_call.1} parent=43 // pred_region
          %s684 = sand.u32 %s40, 1
          %s685 = scalar_lea.sflag [#allocation8], %s684
          %s686 = sand.u32 %s307, 1
          %s687 = smul.addr %s686, 256
          %s688 = scalar_lea.vmem [#allocation9], %s687
          %690 = vsyncadd %s685, 0
          %s691 = smul.addr %s48, 32
          %s692 = smul.addr %s691, 8
          %s693 = scalar_lea.hbm %s10, %s692
          %s694 = sshll.u32 %s693, 4
          %s695 = int_to_ptr.hbm [resolvable:$true] %s694
          %s696 = sshll.u32 %s688, 4
          %s697 = int_to_ptr.vmem [resolvable:$true] %s696
          %702 = dma.hbm_to_vmem [thread:$0]  %s695, 4096, %s697, %s685, 256, 256, 16
        $region76: #{tpu_custom_call.1} parent=43 // pred_fallthru
          _
        // Predicated region
        $region77: #{tpu_custom_call.1} parent=43 // pred_check
          %p703 = pneg %p343
        $region78: #{tpu_custom_call.1} parent=43 // pred_check_branch
          %705 = sbr.rel (%p703) target = $region80
        $region79: #{tpu_custom_call.1} parent=43 // pred_region
          %p706 = scmp.lt.s32.totalorder %s48, 1
          %s707 = scalar_select %p706, %s48, 1
          %s708 = smul.addr %s707, 2
          %s709 = scalar_lea.vmem %s11, %s708
        $region80: #{tpu_custom_call.1} parent=43 // pred_fallthru
          _
        // Predicated region
        $region81: #{tpu_custom_call.1} parent=43 // pred_check
          %p710 = pneg %p369
        $region82: #{tpu_custom_call.1} parent=43 // pred_check_branch
          %712 = sbr.rel (%p710) target = $region84
        $region83: #{tpu_custom_call.1} parent=43 // pred_region
          %s713 = sand.u32 %s359, 1
          %s714 = scalar_lea.sflag [#allocation11], %s713
          %s715 = sand.u32 %s359, 1
          %s716 = smul.addr %s715, 256
          %s717 = scalar_lea.vmem [#allocation10], %s716
          %719 = vsyncadd %s714, 0
          %s720 = smul.addr %s48, 32
          %s721 = smul.addr %s720, 8
          %s722 = scalar_lea.hbm %s12, %s721
          %s723 = sshll.u32 %s722, 4
          %s724 = int_to_ptr.hbm [resolvable:$true] %s723
          %s725 = sshll.u32 %s717, 4
          %s726 = int_to_ptr.vmem [resolvable:$true] %s725
          %731 = dma.hbm_to_vmem [thread:$0]  %s724, 4096, %s726, %s714, 128, 128, 8
        $region84: #{tpu_custom_call.1} parent=43 // pred_fallthru
          _
        // Predicated region
        $region85: #{tpu_custom_call.1} parent=43 // pred_check
          %p732 = pneg %p395
        $region86: #{tpu_custom_call.1} parent=43 // pred_check_branch
          %734 = sbr.rel (%p732) target = $region88
        $region87: #{tpu_custom_call.1} parent=43 // pred_region
          %p735 = scmp.lt.s32.totalorder %s48, 1
          %s736 = scalar_select %p735, %s48, 1
          %s737 = scalar_lea.vmem %s13, %s736
        $region88: #{tpu_custom_call.1} parent=43 // pred_fallthru
          _
        // Predicated region
        $region89: #{tpu_custom_call.1} parent=43 // pred_check
          %p738 = pneg %p421
        $region90: #{tpu_custom_call.1} parent=43 // pred_check_branch
          %740 = sbr.rel (%p738) target = $region92
        $region91: #{tpu_custom_call.1} parent=43 // pred_region
          %p741 = scmp.lt.s32.totalorder %s48, 1
          %s742 = scalar_select %p741, %s48, 1
          %s743 = scalar_lea.vmem %s14, %s742
        $region92: #{tpu_custom_call.1} parent=43 // pred_fallthru
          _
        // Predicated region
        $region93: #{tpu_custom_call.1} parent=43 // pred_check
          %p744 = pneg %p447
        $region94: #{tpu_custom_call.1} parent=43 // pred_check_branch
          %746 = sbr.rel (%p744) target = $region96
        $region95: #{tpu_custom_call.1} parent=43 // pred_region
          %p747 = scmp.lt.s32.totalorder %s48, 1
          %s748 = scalar_select %p747, %s48, 1
          %s749 = scalar_lea.vmem %s15, %s748
        $region96: #{tpu_custom_call.1} parent=43 // pred_fallthru
          _
      $region44: #{tpu_custom_call.1} parent=5 // pred_fallthru
        _
      %p750 = scmp.le.s32.totalorder 1, %s40
      %p751 = scmp.lt.s32.totalorder %s40, 5
      %p752 = pnand %p750, %p751
      %p753 = pneg %p752
      // Predicated region
      $region97: #{tpu_custom_call.1} parent=5 // pred_check
        _
      $region98: #{tpu_custom_call.1} parent=5 // pred_check_branch
        %755 = sbr.rel (%p752) target = $region100
      $region99: #{tpu_custom_call.1} parent=5 // pred_region
        %s756 = ssub.s32 %s40, 1
        %s757 = sand.u32 %s154, 1
        %s758 = scalar_lea.sflag [#allocation5], %s757
        %s759 = sand.u32 %s154, 1
        %s760 = smul.addr %s759, 384
        %s761 = scalar_lea.vmem [#allocation4], %s760
        // Predicated region
        $region101: #{tpu_custom_call.1} parent=99 // pred_check
          %p762 = pneg %p167
        $region102: #{tpu_custom_call.1} parent=99 // pred_check_branch
          %764 = sbr.rel (%p762) target = $region104
        $region103: #{tpu_custom_call.1} parent=99 // pred_region
          %766 = dma.done %s758, 6144
        $region104: #{tpu_custom_call.1} parent=99 // pred_fallthru
          _
        %s767 = sand.u32 %s45, 1
        %s768 = scalar_lea.sflag [#allocation8], %s767
        %s769 = sand.u32 %s206, 1
        %s770 = smul.addr %s769, 128
        %s771 = scalar_lea.vmem [#allocation7], %s770
        // Predicated region
        $region105: #{tpu_custom_call.1} parent=99 // pred_check
          %p772 = pneg %p219
        $region106: #{tpu_custom_call.1} parent=99 // pred_check_branch
          %774 = sbr.rel (%p772) target = $region108
        $region107: #{tpu_custom_call.1} parent=99 // pred_region
          %776 = dma.done %s768, 2048
        $region108: #{tpu_custom_call.1} parent=99 // pred_fallthru
          _
        %s777 = sand.u32 %s45, 1
        %s778 = scalar_lea.sflag [#allocation8], %s777
        %s779 = sand.u32 %s310, 1
        %s780 = smul.addr %s779, 256
        %s781 = scalar_lea.vmem [#allocation9], %s780
        // Predicated region
        $region109: #{tpu_custom_call.1} parent=99 // pred_check
          %p782 = pneg %p323
        $region110: #{tpu_custom_call.1} parent=99 // pred_check_branch
          %784 = sbr.rel (%p782) target = $region112
        $region111: #{tpu_custom_call.1} parent=99 // pred_region
          %786 = dma.done %s778, 4096
        $region112: #{tpu_custom_call.1} parent=99 // pred_fallthru
          _
        %s787 = sand.u32 %s362, 1
        %s788 = scalar_lea.sflag [#allocation11], %s787
        %s789 = sand.u32 %s362, 1
        %s790 = smul.addr %s789, 256
        %s791 = scalar_lea.vmem [#allocation10], %s790
        // Predicated region
        $region113: #{tpu_custom_call.1} parent=99 // pred_check
          %p792 = pneg %p375
        $region114: #{tpu_custom_call.1} parent=99 // pred_check_branch
          %794 = sbr.rel (%p792) target = $region116
        $region115: #{tpu_custom_call.1} parent=99 // pred_region
          %796 = dma.done %s788, 4096
        $region116: #{tpu_custom_call.1} parent=99 // pred_fallthru
          _
        %s797 = smul.u32 2, %s49
        %p798 = scmp.lt.s32.totalorder %s797, 3
        %s799 = scalar_select %p798, %s797, 3
        %s800 = smul.addr %s799, 8
        %s801 = scalar_lea.vmem %s0, %s800
        %p802 = pneg %p78
        %p803 = pneg %p75
        %p804 = pneg %p99
        %p805 = pneg %p96
        %p806 = pneg %p120
        %p807 = pneg %p117
        %p808 = pneg %p141
        %p809 = pneg %p138
        %s810 = sand.u32 %s154, 1
        %s811 = scalar_lea.sflag [#allocation5], %s810
        %s812 = sand.u32 %s154, 1
        %s813 = smul.addr %s812, 384
        %s814 = scalar_lea.vmem [#allocation4], %s813
        %p815 = pneg %p167
        %p816 = pneg %p164
        %p817 = scmp.lt.s32.totalorder %s50, 1
        %s818 = scalar_select %p817, %s50, 1
        %s819 = smul.addr %s818, 3
        %s820 = scalar_lea.vmem %s5, %s819
        %p821 = pneg %p193
        %p822 = pneg %p190
        %s823 = sand.u32 %s45, 1
        %s824 = scalar_lea.sflag [#allocation8], %s823
        %s825 = sand.u32 %s206, 1
        %s826 = smul.addr %s825, 128
        %s827 = scalar_lea.vmem [#allocation7], %s826
        %p828 = pneg %p219
        %p829 = pneg %p216
        %p830 = scmp.lt.s32.totalorder %s50, 1
        %s831 = scalar_select %p830, %s50, 1
        %s832 = scalar_lea.vmem %s7, %s831
        %p833 = pneg %p245
        %p834 = pneg %p242
        %p835 = scmp.lt.s32.totalorder %s50, 1
        %s836 = scalar_select %p835, %s50, 1
        %s837 = scalar_lea.vmem %s8, %s836
        %p838 = pneg %p271
        %p839 = pneg %p268
        %p840 = scmp.lt.s32.totalorder %s50, 1
        %s841 = scalar_select %p840, %s50, 1
        %s842 = scalar_lea.vmem %s9, %s841
        %p843 = pneg %p297
        %p844 = pneg %p294
        %s845 = sand.u32 %s45, 1
        %s846 = scalar_lea.sflag [#allocation8], %s845
        %s847 = sand.u32 %s310, 1
        %s848 = smul.addr %s847, 256
        %s849 = scalar_lea.vmem [#allocation9], %s848
        %p850 = pneg %p323
        %p851 = pneg %p320
        %p852 = scmp.lt.s32.totalorder %s50, 1
        %s853 = scalar_select %p852, %s50, 1
        %s854 = smul.addr %s853, 2
        %s855 = scalar_lea.vmem %s11, %s854
        %p856 = pneg %p349
        %p857 = pneg %p346
        %s858 = sand.u32 %s362, 1
        %s859 = scalar_lea.sflag [#allocation11], %s858
        %s860 = sand.u32 %s362, 1
        %s861 = smul.addr %s860, 256
        %s862 = scalar_lea.vmem [#allocation10], %s861
        %p863 = pneg %p375
        %p864 = pneg %p372
        %p865 = scmp.lt.s32.totalorder %s50, 1
        %s866 = scalar_select %p865, %s50, 1
        %s867 = scalar_lea.vmem %s13, %s866
        %p868 = pneg %p401
        %p869 = pneg %p398
        %p870 = scmp.lt.s32.totalorder %s50, 1
        %s871 = scalar_select %p870, %s50, 1
        %s872 = scalar_lea.vmem %s14, %s871
        %p873 = pneg %p427
        %p874 = pneg %p424
        %p875 = scmp.lt.s32.totalorder %s50, 1
        %s876 = scalar_select %p875, %s50, 1
        %s877 = scalar_lea.vmem %s15, %s876
        %p878 = pneg %p453
        %p879 = pneg %p450
        %p880 = pneg %p474
        %p881 = pneg %p471
        %p882 = pneg %p495
        %p883 = pneg %p492
        %p884 = pneg %p516
        %p885 = pneg %p513
        %p886 = pneg %p537
        %p887 = pneg %p534
        %p888 = pneg %p563
        %p889 = pneg %p560
        %s890 = sand.u32 %s550, 1
        %s891 = scalar_lea.sflag [#allocation6], %s890
        %s892 = sand.u32 %s550, 1
        %s893 = smul.addr %s892, 2
        %s894 = scalar_lea.vmem [#allocation12], %s893
        %s895 = smul.u32 2, %s49
        %p896 = scmp.lt.s32.totalorder %s895, 3
        %s897 = scalar_select %p896, %s895, 3
        %s898 = smul.addr %s897, 8
        %s899 = scalar_lea.vmem %s0, %s898
        %s900 = smul.u32 2, %s49
        %p901 = scmp.lt.s32.totalorder %s50, 1
        %s902 = scalar_select %p901, %s50, 1
        %s903 = smul.addr %s902, 3
        %s904 = scalar_lea.vmem %s5, %s903
        %p905 = scmp.lt.s32.totalorder %s50, 1
        %s906 = scalar_select %p905, %s50, 1
        %s907 = scalar_lea.vmem %s7, %s906
        %p908 = scmp.lt.s32.totalorder %s50, 1
        %s909 = scalar_select %p908, %s50, 1
        %s910 = scalar_lea.vmem %s8, %s909
        %p911 = scmp.lt.s32.totalorder %s50, 1
        %s912 = scalar_select %p911, %s50, 1
        %s913 = scalar_lea.vmem %s9, %s912
        %p914 = scmp.lt.s32.totalorder %s50, 1
        %s915 = scalar_select %p914, %s50, 1
        %s916 = smul.addr %s915, 2
        %s917 = scalar_lea.vmem %s11, %s916
        %p918 = scmp.lt.s32.totalorder %s50, 1
        %s919 = scalar_select %p918, %s50, 1
        %s920 = scalar_lea.vmem %s13, %s919
        %p921 = scmp.lt.s32.totalorder %s50, 1
        %s922 = scalar_select %p921, %s50, 1
        %s923 = scalar_lea.vmem %s14, %s922
        %p924 = scmp.lt.s32.totalorder %s50, 1
        %s925 = scalar_select %p924, %s50, 1
        %s926 = scalar_lea.vmem %s15, %s925
        %p927 = scmp.eq.s32.totalorder %s50, 0
        // Predicated region
        $region117: #{tpu_custom_call.1} parent=99 // pred_check
          %p928 = pneg %p927
        $region118: #{tpu_custom_call.1} parent=99 // pred_check_branch
          %930 = sbr.rel (%p928) target = $region120
        $region119: #{tpu_custom_call.1} parent=99 // pred_region
          %v931 = vld [vmem:[%s899] sm:$0xff]
          %v932 = vld [vmem:[%s899 + $0x8] sm:$0xff]
          %v933 = vld [vmem:[%s2] sm:$0xff]
          %v934 = vld [vmem:[%s2 + $0x8] sm:$0xff]
          %v935 = vld [vmem:[%s2 + $0x10] sm:$0xff]
          %v936 = vld [vmem:[%s2 + $0x18] sm:$0xff]
          %v937 = vld [vmem:[%s2 + $0x20] sm:$0xff]
          %v938 = vld [vmem:[%s2 + $0x28] sm:$0xff]
          %v939 = vld [vmem:[%s2 + $0x30] sm:$0xff]
          %v940 = vld [vmem:[%s2 + $0x38] sm:$0xff]
          %v941 = vld [vmem:[%s2 + $0x40] sm:$0xff]
          %v942 = vld [vmem:[%s2 + $0x48] sm:$0xff]
          %v943 = vld [vmem:[%s2 + $0x50] sm:$0xff]
          %v944 = vld [vmem:[%s2 + $0x58] sm:$0xff]
          %v945 = vld [vmem:[%s2 + $0x60] sm:$0xff]
          %v946 = vld [vmem:[%s2 + $0x68] sm:$0xff]
          %v947 = vld [vmem:[%s2 + $0x70] sm:$0xff]
          %v948 = vld [vmem:[%s2 + $0x78] sm:$0xff]
          %v949 = vld [vmem:[%s3] sm:$0x1]
          %v951 = vperm.slane %v949, 0
          %953 = vmatpush.msra.mxu0 %v948
          %954 = vmatpush.msra.mxu0 %v947
          %955 = vmatpush.msra.mxu0 %v946
          %956 = vmatpush.msra.mxu0 %v945
          %957 = vmatpush.msra.mxu0 %v944
          %958 = vmatpush.msra.mxu0 %v943
          %959 = vmatpush.msra.mxu0 %v942
          %960 = vmatpush.msra.mxu0 %v941
          %961 = vmatpush.msra.mxu0 %v940
          %962 = vmatpush.msra.mxu0 %v939
          %963 = vmatpush.msra.mxu0 %v938
          %964 = vmatpush.msra.mxu0 %v937
          %965 = vmatpush.msra.mxu0 %v936
          %966 = vmatpush.msra.mxu0 %v935
          %967 = vmatpush.msra.mxu0 %v934
          %968 = vmatpush.msra.mxu0 %v933
          %969 = vmatmul.f32.gmra.mxu0 %v931
          %v970 = vpop.f32.mrf.mxu0
          %v971 = vadd.f32 %v951, %v970
          %972 = vmatmul.f32.gmra.mxu0 %v932
          %v973 = vpop.f32.mrf.mxu0
          %v974 = vadd.f32 %v951, %v973
          %975 = vdwg.mxu0
          %v976 = vld [vmem:[%s1] sm:$0xff]
          %v977 = vadd.f32 %v971, %v976
          %v978 = vadd.f32 %v974, %v976
          %979 = vst [vmem:[#allocation2] sm:$0xff] %v977
          %980 = vst [vmem:[#allocation2 + $0x8] sm:$0xff] %v978
        $region120: #{tpu_custom_call.1} parent=99 // pred_fallthru
          _
        %v981 = vld [vmem:[#allocation2] sm:$0xff]
        %v982 = vld [vmem:[#allocation2 + $0x8] sm:$0xff]
        %v983 = vld [vmem:[%s761] sm:$0xff]
        %v984 = vld [vmem:[%s761 + $0x8] sm:$0xff]
        %v985 = vld [vmem:[%s761 + $0x10] sm:$0xff]
        %v986 = vld [vmem:[%s761 + $0x18] sm:$0xff]
        %v987 = vld [vmem:[%s761 + $0x20] sm:$0xff]
        %v988 = vld [vmem:[%s761 + $0x28] sm:$0xff]
        %v989 = vld [vmem:[%s761 + $0x30] sm:$0xff]
        %v990 = vld [vmem:[%s761 + $0x38] sm:$0xff]
        %v991 = vld [vmem:[%s761 + $0x40] sm:$0xff]
        %v992 = vld [vmem:[%s761 + $0x48] sm:$0xff]
        %v993 = vld [vmem:[%s761 + $0x50] sm:$0xff]
        %v994 = vld [vmem:[%s761 + $0x58] sm:$0xff]
        %v995 = vld [vmem:[%s761 + $0x60] sm:$0xff]
        %v996 = vld [vmem:[%s761 + $0x68] sm:$0xff]
        %v997 = vld [vmem:[%s761 + $0x70] sm:$0xff]
        %v998 = vld [vmem:[%s761 + $0x78] sm:$0xff]
        %v999 = vld [vmem:[%s761 + $0x80] sm:$0xff]
        %v1000 = vld [vmem:[%s761 + $0x88] sm:$0xff]
        %v1001 = vld [vmem:[%s761 + $0x90] sm:$0xff]
        %v1002 = vld [vmem:[%s761 + $0x98] sm:$0xff]
        %v1003 = vld [vmem:[%s761 + $0xa0] sm:$0xff]
        %v1004 = vld [vmem:[%s761 + $0xa8] sm:$0xff]
        %v1005 = vld [vmem:[%s761 + $0xb0] sm:$0xff]
        %v1006 = vld [vmem:[%s761 + $0xb8] sm:$0xff]
        %v1007 = vld [vmem:[%s761 + $0xc0] sm:$0xff]
        %v1008 = vld [vmem:[%s761 + $0xc8] sm:$0xff]
        %v1009 = vld [vmem:[%s761 + $0xd0] sm:$0xff]
        %v1010 = vld [vmem:[%s761 + $0xd8] sm:$0xff]
        %v1011 = vld [vmem:[%s761 + $0xe0] sm:$0xff]
        %v1012 = vld [vmem:[%s761 + $0xe8] sm:$0xff]
        %v1013 = vld [vmem:[%s761 + $0xf0] sm:$0xff]
        %v1014 = vld [vmem:[%s761 + $0xf8] sm:$0xff]
        %v1015 = vld [vmem:[%s761 + $0x100] sm:$0xff]
        %v1016 = vld [vmem:[%s761 + $0x108] sm:$0xff]
        %v1017 = vld [vmem:[%s761 + $0x110] sm:$0xff]
        %v1018 = vld [vmem:[%s761 + $0x118] sm:$0xff]
        %v1019 = vld [vmem:[%s761 + $0x120] sm:$0xff]
        %v1020 = vld [vmem:[%s761 + $0x128] sm:$0xff]
        %v1021 = vld [vmem:[%s761 + $0x130] sm:$0xff]
        %v1022 = vld [vmem:[%s761 + $0x138] sm:$0xff]
        %v1023 = vld [vmem:[%s761 + $0x140] sm:$0xff]
        %v1024 = vld [vmem:[%s761 + $0x148] sm:$0xff]
        %v1025 = vld [vmem:[%s761 + $0x150] sm:$0xff]
        %v1026 = vld [vmem:[%s761 + $0x158] sm:$0xff]
        %v1027 = vld [vmem:[%s761 + $0x160] sm:$0xff]
        %v1028 = vld [vmem:[%s761 + $0x168] sm:$0xff]
        %v1029 = vld [vmem:[%s761 + $0x170] sm:$0xff]
        %v1030 = vld [vmem:[%s761 + $0x178] sm:$0xff]
        %v1031 = vld [vmem:[%s904] sm:$0x7]
        %v1033 = vperm.slane %v1031, 0
        %v1034 = vperm.slane %v1031, 1
        %v1035 = vperm.slane %v1031, 2
        %1039 = vmatpush.msra.mxu0 %v1028
        %1040 = vmatpush.msra.mxu0 %v1025
        %1041 = vmatpush.msra.mxu0 %v1022
        %1042 = vmatpush.msra.mxu0 %v1019
        %1043 = vmatpush.msra.mxu0 %v1016
        %1044 = vmatpush.msra.mxu0 %v1013
        %1045 = vmatpush.msra.mxu0 %v1010
        %1046 = vmatpush.msra.mxu0 %v1007
        %1047 = vmatpush.msra.mxu0 %v1004
        %1048 = vmatpush.msra.mxu0 %v1001
        %1049 = vmatpush.msra.mxu0 %v998
        %1050 = vmatpush.msra.mxu0 %v995
        %1051 = vmatpush.msra.mxu0 %v992
        %1052 = vmatpush.msra.mxu0 %v989
        %1053 = vmatpush.msra.mxu0 %v986
        %1054 = vmatpush.msra.mxu0 %v983
        %1055 = vmatmul.f32.gmra.mxu0 %v981
        %v1056 = vpop.f32.mrf.mxu0
        %v1057 = vadd.f32 %v1033, %v1056
        %1058 = vmatmul.f32.gmra.mxu0 %v982
        %v1059 = vpop.f32.mrf.mxu0
        %v1060 = vadd.f32 %v1033, %v1059
        %1061 = vdwg.mxu0
        %1062 = vmatpush.msra.mxu0 %v1029
        %1063 = vmatpush.msra.mxu0 %v1026
        %1064 = vmatpush.msra.mxu0 %v1023
        %1065 = vmatpush.msra.mxu0 %v1020
        %1066 = vmatpush.msra.mxu0 %v1017
        %1067 = vmatpush.msra.mxu0 %v1014
        %1068 = vmatpush.msra.mxu0 %v1011
        %1069 = vmatpush.msra.mxu0 %v1008
        %1070 = vmatpush.msra.mxu0 %v1005
        %1071 = vmatpush.msra.mxu0 %v1002
        %1072 = vmatpush.msra.mxu0 %v999
        %1073 = vmatpush.msra.mxu0 %v996
        %1074 = vmatpush.msra.mxu0 %v993
        %1075 = vmatpush.msra.mxu0 %v990
        %1076 = vmatpush.msra.mxu0 %v987
        %1077 = vmatpush.msra.mxu0 %v984
        %1078 = vmatmul.f32.gmra.mxu0 %v981
        %v1079 = vpop.f32.mrf.mxu0
        %v1080 = vadd.f32 %v1034, %v1079
        %1081 = vmatmul.f32.gmra.mxu0 %v982
        %v1082 = vpop.f32.mrf.mxu0
        %v1083 = vadd.f32 %v1034, %v1082
        %1084 = vdwg.mxu0
        %1085 = vmatpush.msra.mxu0 %v1030
        %1086 = vmatpush.msra.mxu0 %v1027
        %1087 = vmatpush.msra.mxu0 %v1024
        %1088 = vmatpush.msra.mxu0 %v1021
        %1089 = vmatpush.msra.mxu0 %v1018
        %1090 = vmatpush.msra.mxu0 %v1015
        %1091 = vmatpush.msra.mxu0 %v1012
        %1092 = vmatpush.msra.mxu0 %v1009
        %1093 = vmatpush.msra.mxu0 %v1006
        %1094 = vmatpush.msra.mxu0 %v1003
        %1095 = vmatpush.msra.mxu0 %v1000
        %1096 = vmatpush.msra.mxu0 %v997
        %1097 = vmatpush.msra.mxu0 %v994
        %1098 = vmatpush.msra.mxu0 %v991
        %1099 = vmatpush.msra.mxu0 %v988
        %1100 = vmatpush.msra.mxu0 %v985
        %1101 = vmatmul.f32.gmra.mxu0 %v981
        %v1102 = vpop.f32.mrf.mxu0
        %v1103 = vadd.f32 %v1035, %v1102
        %1104 = vmatmul.f32.gmra.mxu0 %v982
        %v1105 = vpop.f32.mrf.mxu0
        %v1106 = vadd.f32 %v1035, %v1105
        %1107 = vdwg.mxu0
        %vm1108 = vcmask 261120
        %v1110 = vsel %vm1108, %v1057, 0
        %v1113 = vsel %vm1108, %v1080, 0
        %1115 = vmatpush.xpose.msra.mxu0 0.0
        %1116 = vmatpush.xpose.msra.mxu0 0.0
        %1117 = vmatpush.xpose.msra.mxu0 0.0
        %1118 = vmatpush.xpose.msra.mxu0 0.0
        %1119 = vmatpush.xpose.msra.mxu0 0.0
        %1120 = vmatpush.xpose.msra.mxu0 0.0
        %1121 = vmatpush.xpose.msra.mxu0 0.0
        %1122 = vmatpush.xpose.msra.mxu0 0.0
        %1123 = vmatpush.xpose.msra.mxu0 0.0
        %1124 = vmatpush.xpose.msra.mxu0 0.0
        %1125 = vmatpush.xpose.msra.mxu0 0.0
        %1126 = vmatpush.xpose.msra.mxu0 0.0
        %1127 = vmatpush.xpose.msra.mxu0 0.0
        %1128 = vmatpush.xpose.msra.mxu0 0.0
        %1129 = vmatpush.xpose.msra.mxu0 0.0
        %1130 = vmatpush.xpose.msra.mxu0 %v1113
        %1131 = vmatmul.f32.gmra.mxu0 %v1110
        %v1132 = vpop.f32.mrf.mxu0
        %v1133 = vadd.f32 0.0, %v1132
        %1134 = vdwg.mxu0
        %v1136 = vsel %vm1108, %v1060, 0
        %v1139 = vsel %vm1108, %v1083, 0
        %1141 = vmatpush.xpose.msra.mxu0 0.0
        %1142 = vmatpush.xpose.msra.mxu0 0.0
        %1143 = vmatpush.xpose.msra.mxu0 0.0
        %1144 = vmatpush.xpose.msra.mxu0 0.0
        %1145 = vmatpush.xpose.msra.mxu0 0.0
        %1146 = vmatpush.xpose.msra.mxu0 0.0
        %1147 = vmatpush.xpose.msra.mxu0 0.0
        %1148 = vmatpush.xpose.msra.mxu0 0.0
        %1149 = vmatpush.xpose.msra.mxu0 0.0
        %1150 = vmatpush.xpose.msra.mxu0 0.0
        %1151 = vmatpush.xpose.msra.mxu0 0.0
        %1152 = vmatpush.xpose.msra.mxu0 0.0
        %1153 = vmatpush.xpose.msra.mxu0 0.0
        %1154 = vmatpush.xpose.msra.mxu0 0.0
        %1155 = vmatpush.xpose.msra.mxu0 0.0
        %1156 = vmatpush.xpose.msra.mxu0 %v1139
        %1157 = vmatmul.f32.gmra.mxu0 %v1136
        %v1158 = vpop.f32.mrf.mxu0
        %v1159 = vadd.f32 0.0, %v1158
        %1160 = vdwg.mxu0
        %vm1161 = vcmask 64512
        %v1162 = vsel %vm1161, %v1133, -inf
        %1163 = vmax.xlane.f32.xlu0 %v1162
        %v1164 = vpop.xlane.xlu0 %1163
        %v1165 = vsel %vm1161, %v1159, -inf
        %1166 = vmax.xlane.f32.xlu0 %v1165
        %v1167 = vpop.xlane.xlu0 %1166
        %v1168 = vsub.f32 %v1133, %v1164
        %v1169 = vsub.f32 %v1159, %v1167
        %v1170 = vmul.f32 %v1168, 1.442695
        %v1171 = vpow.pop %v1170
        %v1172 = vmul.f32 %v1169, 1.442695
        %v1173 = vpow.pop %v1172
        %v1174 = vsel %vm1161, %v1171, 0.0
        %1175 = vadd.xlane.f32.xlu0 %v1174
        %v1176 = vpop.xlane.xlu0 %1175
        %v1177 = vsel %vm1161, %v1173, 0.0
        %1178 = vadd.xlane.f32.xlu0 %v1177
        %v1179 = vpop.xlane.xlu0 %1178
        %v1180 = vrcp.pop %v1176
        %v1181 = vrcp.pop %v1179
        %v1182 = vmul.f32 %v1171, %v1180
        %v1183 = vmul.f32 %v1173, %v1181
        %v1185 = vsel %vm1161, %v1182, 0
        %1187 = vmatpush.msra.mxu0 0.0
        %1188 = vmatpush.msra.mxu0 0.0
        %1189 = vmatpush.msra.mxu0 0.0
        %1190 = vmatpush.msra.mxu0 0.0
        %1191 = vmatpush.msra.mxu0 0.0
        %1192 = vmatpush.msra.mxu0 0.0
        %1193 = vmatpush.msra.mxu0 0.0
        %1194 = vmatpush.msra.mxu0 0.0
        %1195 = vmatpush.msra.mxu0 0.0
        %1196 = vmatpush.msra.mxu0 0.0
        %1197 = vmatpush.msra.mxu0 0.0
        %1198 = vmatpush.msra.mxu0 0.0
        %1199 = vmatpush.msra.mxu0 0.0
        %1200 = vmatpush.msra.mxu0 0.0
        %1201 = vmatpush.msra.mxu0 0.0
        %1202 = vmatpush.msra.mxu0 %v1103
        %1203 = vmatmul.f32.gmra.mxu0 %v1185
        %v1204 = vpop.f32.mrf.mxu0
        %v1205 = vadd.f32 0.0, %v1204
        %1206 = vdwg.mxu0
        %v1208 = vsel %vm1161, %v1183, 0
        %1210 = vmatpush.msra.mxu0 0.0
        %1211 = vmatpush.msra.mxu0 0.0
        %1212 = vmatpush.msra.mxu0 0.0
        %1213 = vmatpush.msra.mxu0 0.0
        %1214 = vmatpush.msra.mxu0 0.0
        %1215 = vmatpush.msra.mxu0 0.0
        %1216 = vmatpush.msra.mxu0 0.0
        %1217 = vmatpush.msra.mxu0 0.0
        %1218 = vmatpush.msra.mxu0 0.0
        %1219 = vmatpush.msra.mxu0 0.0
        %1220 = vmatpush.msra.mxu0 0.0
        %1221 = vmatpush.msra.mxu0 0.0
        %1222 = vmatpush.msra.mxu0 0.0
        %1223 = vmatpush.msra.mxu0 0.0
        %1224 = vmatpush.msra.mxu0 0.0
        %1225 = vmatpush.msra.mxu0 %v1106
        %1226 = vmatmul.f32.gmra.mxu0 %v1208
        %v1227 = vpop.f32.mrf.mxu0
        %v1228 = vadd.f32 0.0, %v1227
        %1229 = vdwg.mxu0
        %1230 = vrot.lane.b32.xlu0 %v1057, 96
        %v1231 = vpop.permute.xlu0 %1230
        %1232 = vrot.lane.b32.xlu0 %v1080, 96
        %v1233 = vpop.permute.xlu0 %1232
        %v1234 = vsel %vm1108, %v1231, 0
        %v1236 = vsel %vm1108, %v1233, 0
        %1238 = vmatpush.xpose.msra.mxu0 0.0
        %1239 = vmatpush.xpose.msra.mxu0 0.0
        %1240 = vmatpush.xpose.msra.mxu0 0.0
        %1241 = vmatpush.xpose.msra.mxu0 0.0
        %1242 = vmatpush.xpose.msra.mxu0 0.0
        %1243 = vmatpush.xpose.msra.mxu0 0.0
        %1244 = vmatpush.xpose.msra.mxu0 0.0
        %1245 = vmatpush.xpose.msra.mxu0 0.0
        %1246 = vmatpush.xpose.msra.mxu0 0.0
        %1247 = vmatpush.xpose.msra.mxu0 0.0
        %1248 = vmatpush.xpose.msra.mxu0 0.0
        %1249 = vmatpush.xpose.msra.mxu0 0.0
        %1250 = vmatpush.xpose.msra.mxu0 0.0
        %1251 = vmatpush.xpose.msra.mxu0 0.0
        %1252 = vmatpush.xpose.msra.mxu0 0.0
        %1253 = vmatpush.xpose.msra.mxu0 %v1236
        %1254 = vmatmul.f32.gmra.mxu0 %v1234
        %v1255 = vpop.f32.mrf.mxu0
        %v1256 = vadd.f32 0.0, %v1255
        %1257 = vdwg.mxu0
        %1258 = vrot.lane.b32.xlu0 %v1060, 96
        %v1259 = vpop.permute.xlu0 %1258
        %1260 = vrot.lane.b32.xlu0 %v1083, 96
        %v1261 = vpop.permute.xlu0 %1260
        %v1262 = vsel %vm1108, %v1259, 0
        %v1264 = vsel %vm1108, %v1261, 0
        %1266 = vmatpush.xpose.msra.mxu0 0.0
        %1267 = vmatpush.xpose.msra.mxu0 0.0
        %1268 = vmatpush.xpose.msra.mxu0 0.0
        %1269 = vmatpush.xpose.msra.mxu0 0.0
        %1270 = vmatpush.xpose.msra.mxu0 0.0
        %1271 = vmatpush.xpose.msra.mxu0 0.0
        %1272 = vmatpush.xpose.msra.mxu0 0.0
        %1273 = vmatpush.xpose.msra.mxu0 0.0
        %1274 = vmatpush.xpose.msra.mxu0 0.0
        %1275 = vmatpush.xpose.msra.mxu0 0.0
        %1276 = vmatpush.xpose.msra.mxu0 0.0
        %1277 = vmatpush.xpose.msra.mxu0 0.0
        %1278 = vmatpush.xpose.msra.mxu0 0.0
        %1279 = vmatpush.xpose.msra.mxu0 0.0
        %1280 = vmatpush.xpose.msra.mxu0 0.0
        %1281 = vmatpush.xpose.msra.mxu0 %v1264
        %1282 = vmatmul.f32.gmra.mxu0 %v1262
        %v1283 = vpop.f32.mrf.mxu0
        %v1284 = vadd.f32 0.0, %v1283
        %1285 = vdwg.mxu0
        %v1286 = vsel %vm1161, %v1256, -inf
        %1287 = vmax.xlane.f32.xlu0 %v1286
        %v1288 = vpop.xlane.xlu0 %1287
        %v1289 = vsel %vm1161, %v1284, -inf
        %1290 = vmax.xlane.f32.xlu0 %v1289
        %v1291 = vpop.xlane.xlu0 %1290
        %v1292 = vsub.f32 %v1256, %v1288
        %v1293 = vsub.f32 %v1284, %v1291
        %v1294 = vmul.f32 %v1292, 1.442695
        %v1295 = vpow.pop %v1294
        %v1296 = vmul.f32 %v1293, 1.442695
        %v1297 = vpow.pop %v1296
        %v1298 = vsel %vm1161, %v1295, 0.0
        %1299 = vadd.xlane.f32.xlu0 %v1298
        %v1300 = vpop.xlane.xlu0 %1299
        %v1301 = vsel %vm1161, %v1297, 0.0
        %1302 = vadd.xlane.f32.xlu0 %v1301
        %v1303 = vpop.xlane.xlu0 %1302
        %v1304 = vrcp.pop %v1300
        %v1305 = vrcp.pop %v1303
        %v1306 = vmul.f32 %v1295, %v1304
        %v1307 = vmul.f32 %v1297, %v1305
        %1309 = vrot.lane.b32.xlu0 %v1103, 96
        %v1310 = vpop.permute.xlu0 %1309
        %v1313 = vsel %vm1161, %v1306, 0
        %1315 = vmatpush.msra.mxu0 0.0
        %1316 = vmatpush.msra.mxu0 0.0
        %1317 = vmatpush.msra.mxu0 0.0
        %1318 = vmatpush.msra.mxu0 0.0
        %1319 = vmatpush.msra.mxu0 0.0
        %1320 = vmatpush.msra.mxu0 0.0
        %1321 = vmatpush.msra.mxu0 0.0
        %1322 = vmatpush.msra.mxu0 0.0
        %1323 = vmatpush.msra.mxu0 0.0
        %1324 = vmatpush.msra.mxu0 0.0
        %1325 = vmatpush.msra.mxu0 0.0
        %1326 = vmatpush.msra.mxu0 0.0
        %1327 = vmatpush.msra.mxu0 0.0
        %1328 = vmatpush.msra.mxu0 0.0
        %1329 = vmatpush.msra.mxu0 0.0
        %1330 = vmatpush.msra.mxu0 %v1310
        %1331 = vmatmul.f32.gmra.mxu0 %v1313
        %v1332 = vpop.f32.mrf.mxu0
        %v1333 = vadd.f32 0.0, %v1332
        %1334 = vdwg.mxu0
        %1336 = vrot.lane.b32.xlu0 %v1106, 96
        %v1337 = vpop.permute.xlu0 %1336
        %v1340 = vsel %vm1161, %v1307, 0
        %1342 = vmatpush.msra.mxu0 0.0
        %1343 = vmatpush.msra.mxu0 0.0
        %1344 = vmatpush.msra.mxu0 0.0
        %1345 = vmatpush.msra.mxu0 0.0
        %1346 = vmatpush.msra.mxu0 0.0
        %1347 = vmatpush.msra.mxu0 0.0
        %1348 = vmatpush.msra.mxu0 0.0
        %1349 = vmatpush.msra.mxu0 0.0
        %1350 = vmatpush.msra.mxu0 0.0
        %1351 = vmatpush.msra.mxu0 0.0
        %1352 = vmatpush.msra.mxu0 0.0
        %1353 = vmatpush.msra.mxu0 0.0
        %1354 = vmatpush.msra.mxu0 0.0
        %1355 = vmatpush.msra.mxu0 0.0
        %1356 = vmatpush.msra.mxu0 0.0
        %1357 = vmatpush.msra.mxu0 %v1337
        %1358 = vmatmul.f32.gmra.mxu0 %v1340
        %v1359 = vpop.f32.mrf.mxu0
        %v1360 = vadd.f32 0.0, %v1359
        %1361 = vdwg.mxu0
        %1362 = vrot.lane.b32.xlu0 %v1057, 64
        %v1363 = vpop.permute.xlu0 %1362
        %1364 = vrot.lane.b32.xlu0 %v1080, 64
        %v1365 = vpop.permute.xlu0 %1364
        %v1366 = vsel %vm1108, %v1363, 0
        %v1368 = vsel %vm1108, %v1365, 0
        %1370 = vmatpush.xpose.msra.mxu0 0.0
        %1371 = vmatpush.xpose.msra.mxu0 0.0
        %1372 = vmatpush.xpose.msra.mxu0 0.0
        %1373 = vmatpush.xpose.msra.mxu0 0.0
        %1374 = vmatpush.xpose.msra.mxu0 0.0
        %1375 = vmatpush.xpose.msra.mxu0 0.0
        %1376 = vmatpush.xpose.msra.mxu0 0.0
        %1377 = vmatpush.xpose.msra.mxu0 0.0
        %1378 = vmatpush.xpose.msra.mxu0 0.0
        %1379 = vmatpush.xpose.msra.mxu0 0.0
        %1380 = vmatpush.xpose.msra.mxu0 0.0
        %1381 = vmatpush.xpose.msra.mxu0 0.0
        %1382 = vmatpush.xpose.msra.mxu0 0.0
        %1383 = vmatpush.xpose.msra.mxu0 0.0
        %1384 = vmatpush.xpose.msra.mxu0 0.0
        %1385 = vmatpush.xpose.msra.mxu0 %v1368
        %1386 = vmatmul.f32.gmra.mxu0 %v1366
        %v1387 = vpop.f32.mrf.mxu0
        %v1388 = vadd.f32 0.0, %v1387
        %1389 = vdwg.mxu0
        %1390 = vrot.lane.b32.xlu0 %v1060, 64
        %v1391 = vpop.permute.xlu0 %1390
        %1392 = vrot.lane.b32.xlu0 %v1083, 64
        %v1393 = vpop.permute.xlu0 %1392
        %v1394 = vsel %vm1108, %v1391, 0
        %v1396 = vsel %vm1108, %v1393, 0
        %1398 = vmatpush.xpose.msra.mxu0 0.0
        %1399 = vmatpush.xpose.msra.mxu0 0.0
        %1400 = vmatpush.xpose.msra.mxu0 0.0
        %1401 = vmatpush.xpose.msra.mxu0 0.0
        %1402 = vmatpush.xpose.msra.mxu0 0.0
        %1403 = vmatpush.xpose.msra.mxu0 0.0
        %1404 = vmatpush.xpose.msra.mxu0 0.0
        %1405 = vmatpush.xpose.msra.mxu0 0.0
        %1406 = vmatpush.xpose.msra.mxu0 0.0
        %1407 = vmatpush.xpose.msra.mxu0 0.0
        %1408 = vmatpush.xpose.msra.mxu0 0.0
        %1409 = vmatpush.xpose.msra.mxu0 0.0
        %1410 = vmatpush.xpose.msra.mxu0 0.0
        %1411 = vmatpush.xpose.msra.mxu0 0.0
        %1412 = vmatpush.xpose.msra.mxu0 0.0
        %1413 = vmatpush.xpose.msra.mxu0 %v1396
        %1414 = vmatmul.f32.gmra.mxu0 %v1394
        %v1415 = vpop.f32.mrf.mxu0
        %v1416 = vadd.f32 0.0, %v1415
        %1417 = vdwg.mxu0
        %v1418 = vsel %vm1161, %v1388, -inf
        %1419 = vmax.xlane.f32.xlu0 %v1418
        %v1420 = vpop.xlane.xlu0 %1419
        %v1421 = vsel %vm1161, %v1416, -inf
        %1422 = vmax.xlane.f32.xlu0 %v1421
        %v1423 = vpop.xlane.xlu0 %1422
        %v1424 = vsub.f32 %v1388, %v1420
        %v1425 = vsub.f32 %v1416, %v1423
        %v1426 = vmul.f32 %v1424, 1.442695
        %v1427 = vpow.pop %v1426
        %v1428 = vmul.f32 %v1425, 1.442695
        %v1429 = vpow.pop %v1428
        %v1430 = vsel %vm1161, %v1427, 0.0
        %1431 = vadd.xlane.f32.xlu0 %v1430
        %v1432 = vpop.xlane.xlu0 %1431
        %v1433 = vsel %vm1161, %v1429, 0.0
        %1434 = vadd.xlane.f32.xlu0 %v1433
        %v1435 = vpop.xlane.xlu0 %1434
        %v1436 = vrcp.pop %v1432
        %v1437 = vrcp.pop %v1435
        %v1438 = vmul.f32 %v1427, %v1436
        %v1439 = vmul.f32 %v1429, %v1437
        %1440 = vrot.lane.b32.xlu0 %v1103, 64
        %v1441 = vpop.permute.xlu0 %1440
        %v1444 = vsel %vm1161, %v1438, 0
        %1446 = vmatpush.msra.mxu0 0.0
        %1447 = vmatpush.msra.mxu0 0.0
        %1448 = vmatpush.msra.mxu0 0.0
        %1449 = vmatpush.msra.mxu0 0.0
        %1450 = vmatpush.msra.mxu0 0.0
        %1451 = vmatpush.msra.mxu0 0.0
        %1452 = vmatpush.msra.mxu0 0.0
        %1453 = vmatpush.msra.mxu0 0.0
        %1454 = vmatpush.msra.mxu0 0.0
        %1455 = vmatpush.msra.mxu0 0.0
        %1456 = vmatpush.msra.mxu0 0.0
        %1457 = vmatpush.msra.mxu0 0.0
        %1458 = vmatpush.msra.mxu0 0.0
        %1459 = vmatpush.msra.mxu0 0.0
        %1460 = vmatpush.msra.mxu0 0.0
        %1461 = vmatpush.msra.mxu0 %v1441
        %1462 = vmatmul.f32.gmra.mxu0 %v1444
        %v1463 = vpop.f32.mrf.mxu0
        %v1464 = vadd.f32 0.0, %v1463
        %1465 = vdwg.mxu0
        %1466 = vrot.lane.b32.xlu0 %v1106, 64
        %v1467 = vpop.permute.xlu0 %1466
        %v1470 = vsel %vm1161, %v1439, 0
        %1472 = vmatpush.msra.mxu0 0.0
        %1473 = vmatpush.msra.mxu0 0.0
        %1474 = vmatpush.msra.mxu0 0.0
        %1475 = vmatpush.msra.mxu0 0.0
        %1476 = vmatpush.msra.mxu0 0.0
        %1477 = vmatpush.msra.mxu0 0.0
        %1478 = vmatpush.msra.mxu0 0.0
        %1479 = vmatpush.msra.mxu0 0.0
        %1480 = vmatpush.msra.mxu0 0.0
        %1481 = vmatpush.msra.mxu0 0.0
        %1482 = vmatpush.msra.mxu0 0.0
        %1483 = vmatpush.msra.mxu0 0.0
        %1484 = vmatpush.msra.mxu0 0.0
        %1485 = vmatpush.msra.mxu0 0.0
        %1486 = vmatpush.msra.mxu0 0.0
        %1487 = vmatpush.msra.mxu0 %v1467
        %1488 = vmatmul.f32.gmra.mxu0 %v1470
        %v1489 = vpop.f32.mrf.mxu0
        %v1490 = vadd.f32 0.0, %v1489
        %1491 = vdwg.mxu0
        %1492 = vrot.lane.b32.xlu0 %v1057, 32
        %v1493 = vpop.permute.xlu0 %1492
        %1494 = vrot.lane.b32.xlu0 %v1080, 32
        %v1495 = vpop.permute.xlu0 %1494
        %v1496 = vsel %vm1108, %v1493, 0
        %v1498 = vsel %vm1108, %v1495, 0
        %1500 = vmatpush.xpose.msra.mxu0 0.0
        %1501 = vmatpush.xpose.msra.mxu0 0.0
        %1502 = vmatpush.xpose.msra.mxu0 0.0
        %1503 = vmatpush.xpose.msra.mxu0 0.0
        %1504 = vmatpush.xpose.msra.mxu0 0.0
        %1505 = vmatpush.xpose.msra.mxu0 0.0
        %1506 = vmatpush.xpose.msra.mxu0 0.0
        %1507 = vmatpush.xpose.msra.mxu0 0.0
        %1508 = vmatpush.xpose.msra.mxu0 0.0
        %1509 = vmatpush.xpose.msra.mxu0 0.0
        %1510 = vmatpush.xpose.msra.mxu0 0.0
        %1511 = vmatpush.xpose.msra.mxu0 0.0
        %1512 = vmatpush.xpose.msra.mxu0 0.0
        %1513 = vmatpush.xpose.msra.mxu0 0.0
        %1514 = vmatpush.xpose.msra.mxu0 0.0
        %1515 = vmatpush.xpose.msra.mxu0 %v1498
        %1516 = vmatmul.f32.gmra.mxu0 %v1496
        %v1517 = vpop.f32.mrf.mxu0
        %v1518 = vadd.f32 0.0, %v1517
        %1519 = vdwg.mxu0
        %1520 = vrot.lane.b32.xlu0 %v1060, 32
        %v1521 = vpop.permute.xlu0 %1520
        %1522 = vrot.lane.b32.xlu0 %v1083, 32
        %v1523 = vpop.permute.xlu0 %1522
        %v1524 = vsel %vm1108, %v1521, 0
        %v1526 = vsel %vm1108, %v1523, 0
        %1528 = vmatpush.xpose.msra.mxu0 0.0
        %1529 = vmatpush.xpose.msra.mxu0 0.0
        %1530 = vmatpush.xpose.msra.mxu0 0.0
        %1531 = vmatpush.xpose.msra.mxu0 0.0
        %1532 = vmatpush.xpose.msra.mxu0 0.0
        %1533 = vmatpush.xpose.msra.mxu0 0.0
        %1534 = vmatpush.xpose.msra.mxu0 0.0
        %1535 = vmatpush.xpose.msra.mxu0 0.0
        %1536 = vmatpush.xpose.msra.mxu0 0.0
        %1537 = vmatpush.xpose.msra.mxu0 0.0
        %1538 = vmatpush.xpose.msra.mxu0 0.0
        %1539 = vmatpush.xpose.msra.mxu0 0.0
        %1540 = vmatpush.xpose.msra.mxu0 0.0
        %1541 = vmatpush.xpose.msra.mxu0 0.0
        %1542 = vmatpush.xpose.msra.mxu0 0.0
        %1543 = vmatpush.xpose.msra.mxu0 %v1526
        %1544 = vmatmul.f32.gmra.mxu0 %v1524
        %v1545 = vpop.f32.mrf.mxu0
        %v1546 = vadd.f32 0.0, %v1545
        %1547 = vdwg.mxu0
        %v1548 = vsel %vm1161, %v1518, -inf
        %1549 = vmax.xlane.f32.xlu0 %v1548
        %v1550 = vpop.xlane.xlu0 %1549
        %v1551 = vsel %vm1161, %v1546, -inf
        %1552 = vmax.xlane.f32.xlu0 %v1551
        %v1553 = vpop.xlane.xlu0 %1552
        %v1554 = vsub.f32 %v1518, %v1550
        %v1555 = vsub.f32 %v1546, %v1553
        %v1556 = vmul.f32 %v1554, 1.442695
        %v1557 = vpow.pop %v1556
        %v1558 = vmul.f32 %v1555, 1.442695
        %v1559 = vpow.pop %v1558
        %v1560 = vsel %vm1161, %v1557, 0.0
        %1561 = vadd.xlane.f32.xlu0 %v1560
        %v1562 = vpop.xlane.xlu0 %1561
        %v1563 = vsel %vm1161, %v1559, 0.0
        %1564 = vadd.xlane.f32.xlu0 %v1563
        %v1565 = vpop.xlane.xlu0 %1564
        %v1566 = vrcp.pop %v1562
        %v1567 = vrcp.pop %v1565
        %v1568 = vmul.f32 %v1557, %v1566
        %v1569 = vmul.f32 %v1559, %v1567
        %1570 = vrot.lane.b32.xlu0 %v1103, 32
        %v1571 = vpop.permute.xlu0 %1570
        %v1574 = vsel %vm1161, %v1568, 0
        %1576 = vmatpush.msra.mxu0 0.0
        %1577 = vmatpush.msra.mxu0 0.0
        %1578 = vmatpush.msra.mxu0 0.0
        %1579 = vmatpush.msra.mxu0 0.0
        %1580 = vmatpush.msra.mxu0 0.0
        %1581 = vmatpush.msra.mxu0 0.0
        %1582 = vmatpush.msra.mxu0 0.0
        %1583 = vmatpush.msra.mxu0 0.0
        %1584 = vmatpush.msra.mxu0 0.0
        %1585 = vmatpush.msra.mxu0 0.0
        %1586 = vmatpush.msra.mxu0 0.0
        %1587 = vmatpush.msra.mxu0 0.0
        %1588 = vmatpush.msra.mxu0 0.0
        %1589 = vmatpush.msra.mxu0 0.0
        %1590 = vmatpush.msra.mxu0 0.0
        %1591 = vmatpush.msra.mxu0 %v1571
        %1592 = vmatmul.f32.gmra.mxu0 %v1574
        %v1593 = vpop.f32.mrf.mxu0
        %v1594 = vadd.f32 0.0, %v1593
        %1595 = vdwg.mxu0
        %1596 = vrot.lane.b32.xlu0 %v1106, 32
        %v1597 = vpop.permute.xlu0 %1596
        %v1600 = vsel %vm1161, %v1569, 0
        %1602 = vmatpush.msra.mxu0 0.0
        %1603 = vmatpush.msra.mxu0 0.0
        %1604 = vmatpush.msra.mxu0 0.0
        %1605 = vmatpush.msra.mxu0 0.0
        %1606 = vmatpush.msra.mxu0 0.0
        %1607 = vmatpush.msra.mxu0 0.0
        %1608 = vmatpush.msra.mxu0 0.0
        %1609 = vmatpush.msra.mxu0 0.0
        %1610 = vmatpush.msra.mxu0 0.0
        %1611 = vmatpush.msra.mxu0 0.0
        %1612 = vmatpush.msra.mxu0 0.0
        %1613 = vmatpush.msra.mxu0 0.0
        %1614 = vmatpush.msra.mxu0 0.0
        %1615 = vmatpush.msra.mxu0 0.0
        %1616 = vmatpush.msra.mxu0 0.0
        %1617 = vmatpush.msra.mxu0 %v1597
        %1618 = vmatmul.f32.gmra.mxu0 %v1600
        %v1619 = vpop.f32.mrf.mxu0
        %v1620 = vadd.f32 0.0, %v1619
        %1621 = vdwg.mxu0
        %1624 = vrot.lane.b32.xlu0 %v1333, 32
        %v1625 = vpop.permute.xlu0 %1624
        %1626 = vrot.lane.b32.xlu0 %v1360, 32
        %v1627 = vpop.permute.xlu0 %1626
        %1632 = vrot.lane.b32.xlu0 %v1464, 64
        %v1633 = vpop.permute.xlu0 %1632
        %1634 = vrot.lane.b32.xlu0 %v1490, 64
        %v1635 = vpop.permute.xlu0 %1634
        %1640 = vrot.lane.b32.xlu0 %v1594, 96
        %v1641 = vpop.permute.xlu0 %1640
        %1642 = vrot.lane.b32.xlu0 %v1620, 96
        %v1643 = vpop.permute.xlu0 %1642
        %v1646 = vsel %vm1108, %v1205, %v1625
        %v1647 = vsel %vm1108, %v1228, %v1627
        %vm1648 = vcmask 523264
        %v1649 = vsel %vm1648, %v1646, %v1633
        %v1650 = vsel %vm1648, %v1647, %v1635
        %vm1651 = vcmask 785408
        %v1652 = vsel %vm1651, %v1649, %v1641
        %v1653 = vsel %vm1651, %v1650, %v1643
        %v1654 = vld [vmem:[%s771] sm:$0xff]
        %v1655 = vld [vmem:[%s771 + $0x8] sm:$0xff]
        %v1656 = vld [vmem:[%s771 + $0x10] sm:$0xff]
        %v1657 = vld [vmem:[%s771 + $0x18] sm:$0xff]
        %v1658 = vld [vmem:[%s771 + $0x20] sm:$0xff]
        %v1659 = vld [vmem:[%s771 + $0x28] sm:$0xff]
        %v1660 = vld [vmem:[%s771 + $0x30] sm:$0xff]
        %v1661 = vld [vmem:[%s771 + $0x38] sm:$0xff]
        %v1662 = vld [vmem:[%s771 + $0x40] sm:$0xff]
        %v1663 = vld [vmem:[%s771 + $0x48] sm:$0xff]
        %v1664 = vld [vmem:[%s771 + $0x50] sm:$0xff]
        %v1665 = vld [vmem:[%s771 + $0x58] sm:$0xff]
        %v1666 = vld [vmem:[%s771 + $0x60] sm:$0xff]
        %v1667 = vld [vmem:[%s771 + $0x68] sm:$0xff]
        %v1668 = vld [vmem:[%s771 + $0x70] sm:$0xff]
        %v1669 = vld [vmem:[%s771 + $0x78] sm:$0xff]
        %v1670 = vld [vmem:[%s907] sm:$0x1]
        %v1672 = vperm.slane %v1670, 0
        %1674 = vmatpush.msra.mxu0 %v1669
        %1675 = vmatpush.msra.mxu0 %v1668
        %1676 = vmatpush.msra.mxu0 %v1667
        %1677 = vmatpush.msra.mxu0 %v1666
        %1678 = vmatpush.msra.mxu0 %v1665
        %1679 = vmatpush.msra.mxu0 %v1664
        %1680 = vmatpush.msra.mxu0 %v1663
        %1681 = vmatpush.msra.mxu0 %v1662
        %1682 = vmatpush.msra.mxu0 %v1661
        %1683 = vmatpush.msra.mxu0 %v1660
        %1684 = vmatpush.msra.mxu0 %v1659
        %1685 = vmatpush.msra.mxu0 %v1658
        %1686 = vmatpush.msra.mxu0 %v1657
        %1687 = vmatpush.msra.mxu0 %v1656
        %1688 = vmatpush.msra.mxu0 %v1655
        %1689 = vmatpush.msra.mxu0 %v1654
        %1690 = vmatmul.f32.gmra.mxu0 %v1652
        %v1691 = vpop.f32.mrf.mxu0
        %v1692 = vadd.f32 %v1672, %v1691
        %1693 = vmatmul.f32.gmra.mxu0 %v1653
        %v1694 = vpop.f32.mrf.mxu0
        %v1695 = vadd.f32 %v1672, %v1694
        %1696 = vdwg.mxu0
        %v1697 = vadd.f32 %v981, %v1692
        %v1698 = vadd.f32 %v982, %v1695
        %v1699 = vld [vmem:[%s910] sm:$0x1]
        %v1701 = vperm.slane %v1699, 0
        %v1703 = vmul.f32 %v1697, %v1701
        %v1704 = vmul.f32 %v1698, %v1701
        %v1705 = vld [vmem:[%s913] sm:$0x1]
        %v1707 = vperm.slane %v1705, 0
        %v1709 = vadd.f32 %v1703, %v1707
        %v1710 = vadd.f32 %v1704, %v1707
        %v1711 = vld [vmem:[%s781] sm:$0xff]
        %v1712 = vld [vmem:[%s781 + $0x8] sm:$0xff]
        %v1713 = vld [vmem:[%s781 + $0x10] sm:$0xff]
        %v1714 = vld [vmem:[%s781 + $0x18] sm:$0xff]
        %v1715 = vld [vmem:[%s781 + $0x20] sm:$0xff]
        %v1716 = vld [vmem:[%s781 + $0x28] sm:$0xff]
        %v1717 = vld [vmem:[%s781 + $0x30] sm:$0xff]
        %v1718 = vld [vmem:[%s781 + $0x38] sm:$0xff]
        %v1719 = vld [vmem:[%s781 + $0x40] sm:$0xff]
        %v1720 = vld [vmem:[%s781 + $0x48] sm:$0xff]
        %v1721 = vld [vmem:[%s781 + $0x50] sm:$0xff]
        %v1722 = vld [vmem:[%s781 + $0x58] sm:$0xff]
        %v1723 = vld [vmem:[%s781 + $0x60] sm:$0xff]
        %v1724 = vld [vmem:[%s781 + $0x68] sm:$0xff]
        %v1725 = vld [vmem:[%s781 + $0x70] sm:$0xff]
        %v1726 = vld [vmem:[%s781 + $0x78] sm:$0xff]
        %v1727 = vld [vmem:[%s781 + $0x80] sm:$0xff]
        %v1728 = vld [vmem:[%s781 + $0x88] sm:$0xff]
        %v1729 = vld [vmem:[%s781 + $0x90] sm:$0xff]
        %v1730 = vld [vmem:[%s781 + $0x98] sm:$0xff]
        %v1731 = vld [vmem:[%s781 + $0xa0] sm:$0xff]
        %v1732 = vld [vmem:[%s781 + $0xa8] sm:$0xff]
        %v1733 = vld [vmem:[%s781 + $0xb0] sm:$0xff]
        %v1734 = vld [vmem:[%s781 + $0xb8] sm:$0xff]
        %v1735 = vld [vmem:[%s781 + $0xc0] sm:$0xff]
        %v1736 = vld [vmem:[%s781 + $0xc8] sm:$0xff]
        %v1737 = vld [vmem:[%s781 + $0xd0] sm:$0xff]
        %v1738 = vld [vmem:[%s781 + $0xd8] sm:$0xff]
        %v1739 = vld [vmem:[%s781 + $0xe0] sm:$0xff]
        %v1740 = vld [vmem:[%s781 + $0xe8] sm:$0xff]
        %v1741 = vld [vmem:[%s781 + $0xf0] sm:$0xff]
        %v1742 = vld [vmem:[%s781 + $0xf8] sm:$0xff]
        %v1743 = vld [vmem:[%s917] sm:$0x3]
        %v1745 = vperm.slane %v1743, 0
        %v1746 = vperm.slane %v1743, 1
        %1749 = vmatpush.msra.mxu0 %v1741
        %1750 = vmatpush.msra.mxu0 %v1739
        %1751 = vmatpush.msra.mxu0 %v1737
        %1752 = vmatpush.msra.mxu0 %v1735
        %1753 = vmatpush.msra.mxu0 %v1733
        %1754 = vmatpush.msra.mxu0 %v1731
        %1755 = vmatpush.msra.mxu0 %v1729
        %1756 = vmatpush.msra.mxu0 %v1727
        %1757 = vmatpush.msra.mxu0 %v1725
        %1758 = vmatpush.msra.mxu0 %v1723
        %1759 = vmatpush.msra.mxu0 %v1721
        %1760 = vmatpush.msra.mxu0 %v1719
        %1761 = vmatpush.msra.mxu0 %v1717
        %1762 = vmatpush.msra.mxu0 %v1715
        %1763 = vmatpush.msra.mxu0 %v1713
        %1764 = vmatpush.msra.mxu0 %v1711
        %1765 = vmatmul.f32.gmra.mxu0 %v1709
        %v1766 = vpop.f32.mrf.mxu0
        %v1767 = vadd.f32 %v1745, %v1766
        %1768 = vmatmul.f32.gmra.mxu0 %v1710
        %v1769 = vpop.f32.mrf.mxu0
        %v1770 = vadd.f32 %v1745, %v1769
        %1771 = vdwg.mxu0
        %1772 = vmatpush.msra.mxu0 %v1742
        %1773 = vmatpush.msra.mxu0 %v1740
        %1774 = vmatpush.msra.mxu0 %v1738
        %1775 = vmatpush.msra.mxu0 %v1736
        %1776 = vmatpush.msra.mxu0 %v1734
        %1777 = vmatpush.msra.mxu0 %v1732
        %1778 = vmatpush.msra.mxu0 %v1730
        %1779 = vmatpush.msra.mxu0 %v1728
        %1780 = vmatpush.msra.mxu0 %v1726
        %1781 = vmatpush.msra.mxu0 %v1724
        %1782 = vmatpush.msra.mxu0 %v1722
        %1783 = vmatpush.msra.mxu0 %v1720
        %1784 = vmatpush.msra.mxu0 %v1718
        %1785 = vmatpush.msra.mxu0 %v1716
        %1786 = vmatpush.msra.mxu0 %v1714
        %1787 = vmatpush.msra.mxu0 %v1712
        %1788 = vmatmul.f32.gmra.mxu0 %v1709
        %v1789 = vpop.f32.mrf.mxu0
        %v1790 = vadd.f32 %v1746, %v1789
        %1791 = vmatmul.f32.gmra.mxu0 %v1710
        %v1792 = vpop.f32.mrf.mxu0
        %v1793 = vadd.f32 %v1746, %v1792
        %1794 = vdwg.mxu0
        %v1795 = vmax.f32 %v1767, 0.0
        %v1796 = vmax.f32 %v1790, 0.0
        %v1797 = vmax.f32 %v1770, 0.0
        %v1798 = vmax.f32 %v1793, 0.0
        %v1799 = vld [vmem:[%s791] sm:$0xff]
        %v1800 = vld [vmem:[%s791 + $0x8] sm:$0xff]
        %v1801 = vld [vmem:[%s791 + $0x10] sm:$0xff]
        %v1802 = vld [vmem:[%s791 + $0x18] sm:$0xff]
        %v1803 = vld [vmem:[%s791 + $0x20] sm:$0xff]
        %v1804 = vld [vmem:[%s791 + $0x28] sm:$0xff]
        %v1805 = vld [vmem:[%s791 + $0x30] sm:$0xff]
        %v1806 = vld [vmem:[%s791 + $0x38] sm:$0xff]
        %v1807 = vld [vmem:[%s791 + $0x40] sm:$0xff]
        %v1808 = vld [vmem:[%s791 + $0x48] sm:$0xff]
        %v1809 = vld [vmem:[%s791 + $0x50] sm:$0xff]
        %v1810 = vld [vmem:[%s791 + $0x58] sm:$0xff]
        %v1811 = vld [vmem:[%s791 + $0x60] sm:$0xff]
        %v1812 = vld [vmem:[%s791 + $0x68] sm:$0xff]
        %v1813 = vld [vmem:[%s791 + $0x70] sm:$0xff]
        %v1814 = vld [vmem:[%s791 + $0x78] sm:$0xff]
        %v1815 = vld [vmem:[%s791 + $0x80] sm:$0xff]
        %v1816 = vld [vmem:[%s791 + $0x88] sm:$0xff]
        %v1817 = vld [vmem:[%s791 + $0x90] sm:$0xff]
        %v1818 = vld [vmem:[%s791 + $0x98] sm:$0xff]
        %v1819 = vld [vmem:[%s791 + $0xa0] sm:$0xff]
        %v1820 = vld [vmem:[%s791 + $0xa8] sm:$0xff]
        %v1821 = vld [vmem:[%s791 + $0xb0] sm:$0xff]
        %v1822 = vld [vmem:[%s791 + $0xb8] sm:$0xff]
        %v1823 = vld [vmem:[%s791 + $0xc0] sm:$0xff]
        %v1824 = vld [vmem:[%s791 + $0xc8] sm:$0xff]
        %v1825 = vld [vmem:[%s791 + $0xd0] sm:$0xff]
        %v1826 = vld [vmem:[%s791 + $0xd8] sm:$0xff]
        %v1827 = vld [vmem:[%s791 + $0xe0] sm:$0xff]
        %v1828 = vld [vmem:[%s791 + $0xe8] sm:$0xff]
        %v1829 = vld [vmem:[%s791 + $0xf0] sm:$0xff]
        %v1830 = vld [vmem:[%s791 + $0xf8] sm:$0xff]
        %v1831 = vld [vmem:[%s920] sm:$0x1]
        %v1833 = vperm.slane %v1831, 0
        %1835 = vmatpush.msra.mxu0 %v1814
        %1836 = vmatpush.msra.mxu0 %v1813
        %1837 = vmatpush.msra.mxu0 %v1812
        %1838 = vmatpush.msra.mxu0 %v1811
        %1839 = vmatpush.msra.mxu0 %v1810
        %1840 = vmatpush.msra.mxu0 %v1809
        %1841 = vmatpush.msra.mxu0 %v1808
        %1842 = vmatpush.msra.mxu0 %v1807
        %1843 = vmatpush.msra.mxu0 %v1806
        %1844 = vmatpush.msra.mxu0 %v1805
        %1845 = vmatpush.msra.mxu0 %v1804
        %1846 = vmatpush.msra.mxu0 %v1803
        %1847 = vmatpush.msra.mxu0 %v1802
        %1848 = vmatpush.msra.mxu0 %v1801
        %1849 = vmatpush.msra.mxu0 %v1800
        %1850 = vmatpush.msra.mxu0 %v1799
        %1851 = vmatmul.f32.gmra.mxu0 %v1795
        %v1852 = vpop.f32.mrf.mxu0
        %v1853 = vadd.f32 %v1833, %v1852
        %1854 = vmatmul.f32.gmra.mxu0 %v1797
        %v1855 = vpop.f32.mrf.mxu0
        %v1856 = vadd.f32 %v1833, %v1855
        %1857 = vdwg.mxu0
        %1858 = vmatpush.msra.mxu0 %v1830
        %1859 = vmatpush.msra.mxu0 %v1829
        %1860 = vmatpush.msra.mxu0 %v1828
        %1861 = vmatpush.msra.mxu0 %v1827
        %1862 = vmatpush.msra.mxu0 %v1826
        %1863 = vmatpush.msra.mxu0 %v1825
        %1864 = vmatpush.msra.mxu0 %v1824
        %1865 = vmatpush.msra.mxu0 %v1823
        %1866 = vmatpush.msra.mxu0 %v1822
        %1867 = vmatpush.msra.mxu0 %v1821
        %1868 = vmatpush.msra.mxu0 %v1820
        %1869 = vmatpush.msra.mxu0 %v1819
        %1870 = vmatpush.msra.mxu0 %v1818
        %1871 = vmatpush.msra.mxu0 %v1817
        %1872 = vmatpush.msra.mxu0 %v1816
        %1873 = vmatpush.msra.mxu0 %v1815
        %1874 = vmatmul.f32.gmra.mxu0 %v1796
        %v1875 = vpop.f32.mrf.mxu0
        %v1876 = vadd.f32 %v1853, %v1875
        %1877 = vmatmul.f32.gmra.mxu0 %v1798
        %v1878 = vpop.f32.mrf.mxu0
        %v1879 = vadd.f32 %v1856, %v1878
        %1880 = vdwg.mxu0
        %v1881 = vadd.f32 %v1709, %v1876
        %v1882 = vadd.f32 %v1710, %v1879
        %v1883 = vld [vmem:[%s923] sm:$0x1]
        %v1885 = vperm.slane %v1883, 0
        %v1887 = vmul.f32 %v1881, %v1885
        %v1888 = vmul.f32 %v1882, %v1885
        %v1889 = vld [vmem:[%s926] sm:$0x1]
        %v1891 = vperm.slane %v1889, 0
        %v1893 = vadd.f32 %v1887, %v1891
        %v1894 = vadd.f32 %v1888, %v1891
        %1895 = vst [vmem:[#allocation2] sm:$0xff] %v1893
        %1896 = vst [vmem:[#allocation2 + $0x8] sm:$0xff] %v1894
        %p1897 = scmp.eq.s32.totalorder %s50, 1
        // Predicated region
        $region121: #{tpu_custom_call.1} parent=99 // pred_check
          %p1898 = pneg %p1897
        $region122: #{tpu_custom_call.1} parent=99 // pred_check_branch
          %1900 = sbr.rel (%p1898) target = $region124
        $region123: #{tpu_custom_call.1} parent=99 // pred_region
          %v1901 = vrot.slane %v1893, 4
          %v1902 = vadd.f32 %v1893, %v1901
          %v1903 = vrot.slane %v1902, 2
          %v1904 = vadd.f32 %v1902, %v1903
          %v1905 = vrot.slane %v1904, 1
          %v1906 = vadd.f32 %v1904, %v1905
          %v1907 = vrot.slane %v1894, 4
          %v1908 = vadd.f32 %v1894, %v1907
          %v1909 = vrot.slane %v1908, 2
          %v1910 = vadd.f32 %v1908, %v1909
          %v1911 = vrot.slane %v1910, 1
          %v1912 = vadd.f32 %v1910, %v1911
          %v1913 = vrcp.pop 8.0
          %v1914 = vmul.f32 8.0, %v1913
          %v1915 = vsub.f32 1.0, %v1914
          %v1916 = vmul.f32 %v1913, %v1915
          %v1917 = vadd.f32 %v1913, %v1916
          %vm1918 = vweird.f32 %v1913
          %v1919 = vsel %vm1918, %v1913, %v1917
          %v1920 = vmul.f32 %v1906, %v1919
          %v1921 = vmul.f32 %v1912, %v1919
          %v1922 = vld [vmem:[%s16] sm:$0xff]
          %v1923 = vld [vmem:[%s16 + $0x8] sm:$0xff]
          %v1924 = vld [vmem:[%s16 + $0x10] sm:$0xff]
          %v1925 = vld [vmem:[%s16 + $0x18] sm:$0xff]
          %v1926 = vld [vmem:[%s16 + $0x20] sm:$0xff]
          %v1927 = vld [vmem:[%s16 + $0x28] sm:$0xff]
          %v1928 = vld [vmem:[%s16 + $0x30] sm:$0xff]
          %v1929 = vld [vmem:[%s16 + $0x38] sm:$0xff]
          %v1930 = vld [vmem:[%s16 + $0x40] sm:$0xff]
          %v1931 = vld [vmem:[%s16 + $0x48] sm:$0xff]
          %v1932 = vld [vmem:[%s16 + $0x50] sm:$0xff]
          %v1933 = vld [vmem:[%s16 + $0x58] sm:$0xff]
          %v1934 = vld [vmem:[%s16 + $0x60] sm:$0xff]
          %v1935 = vld [vmem:[%s16 + $0x68] sm:$0xff]
          %v1936 = vld [vmem:[%s16 + $0x70] sm:$0xff]
          %v1937 = vld [vmem:[%s16 + $0x78] sm:$0xff]
          %v1938 = vld [vmem:[%s17] sm:$0x1]
          %v1940 = vperm.slane %v1938, 0
          %vm1944 = vcmask 1041409
          %v1945 = vsel %vm1944, %v1921, %v1920
          %1947 = vmatpush.msra.mxu0 %v1937
          %1948 = vmatpush.msra.mxu0 %v1936
          %1949 = vmatpush.msra.mxu0 %v1935
          %1950 = vmatpush.msra.mxu0 %v1934
          %1951 = vmatpush.msra.mxu0 %v1933
          %1952 = vmatpush.msra.mxu0 %v1932
          %1953 = vmatpush.msra.mxu0 %v1931
          %1954 = vmatpush.msra.mxu0 %v1930
          %1955 = vmatpush.msra.mxu0 %v1929
          %1956 = vmatpush.msra.mxu0 %v1928
          %1957 = vmatpush.msra.mxu0 %v1927
          %1958 = vmatpush.msra.mxu0 %v1926
          %1959 = vmatpush.msra.mxu0 %v1925
          %1960 = vmatpush.msra.mxu0 %v1924
          %1961 = vmatpush.msra.mxu0 %v1923
          %1962 = vmatpush.msra.mxu0 %v1922
          %1963 = vmatmul.f32.gmra.mxu0 %v1945
          %v1964 = vpop.f32.mrf.mxu0
          %v1965 = vadd.f32 %v1940, %v1964
          %1966 = vdwg.mxu0
          %v1967 = vmax.f32 %v1965, 0.0
          %v1968 = vld [vmem:[%s18] sm:$0xff]
          %v1969 = vld [vmem:[%s18 + $0x8] sm:$0xff]
          %v1970 = vld [vmem:[%s18 + $0x10] sm:$0xff]
          %v1971 = vld [vmem:[%s18 + $0x18] sm:$0xff]
          %v1972 = vld [vmem:[%s18 + $0x20] sm:$0xff]
          %v1973 = vld [vmem:[%s18 + $0x28] sm:$0xff]
          %v1974 = vld [vmem:[%s18 + $0x30] sm:$0xff]
          %v1975 = vld [vmem:[%s18 + $0x38] sm:$0xff]
          %v1976 = vld [vmem:[#allocation3] sm:$0x1]
          %v1978 = vperm.slane %v1976, 0
          %v1981 = vsel %vm1648, %v1967, 0
          %1983 = vmatpush.msra.mxu0 0.0
          %1984 = vmatpush.msra.mxu0 0.0
          %1985 = vmatpush.msra.mxu0 0.0
          %1986 = vmatpush.msra.mxu0 0.0
          %1987 = vmatpush.msra.mxu0 0.0
          %1988 = vmatpush.msra.mxu0 0.0
          %1989 = vmatpush.msra.mxu0 0.0
          %1990 = vmatpush.msra.mxu0 0.0
          %1991 = vmatpush.msra.mxu0 %v1975
          %1992 = vmatpush.msra.mxu0 %v1974
          %1993 = vmatpush.msra.mxu0 %v1973
          %1994 = vmatpush.msra.mxu0 %v1972
          %1995 = vmatpush.msra.mxu0 %v1971
          %1996 = vmatpush.msra.mxu0 %v1970
          %1997 = vmatpush.msra.mxu0 %v1969
          %1998 = vmatpush.msra.mxu0 %v1968
          %1999 = vmatmul.f32.gmra.mxu0 %v1981
          %v2000 = vpop.f32.mrf.mxu0
          %v2001 = vadd.f32 %v1978, %v2000
          %2002 = vdwg.mxu0
          %2004 = vset.pattern.permute.xlu0 0
          %2005 = vperm.xlu0 %2004, %v2001
          %v2006 = vpop.permute.xlu0 %2005
          %2008 = vst [vmem:[%s894] sm:$0x3] %v2006
        $region124: #{tpu_custom_call.1} parent=99 // pred_fallthru
          _
        %s2009 = sand.u32 %s550, 1
        %s2010 = scalar_lea.sflag [#allocation6], %s2009
        %s2011 = sand.u32 %s550, 1
        %s2012 = smul.addr %s2011, 2
        %s2013 = scalar_lea.vmem [#allocation12], %s2012
        // Predicated region
        $region125: #{tpu_custom_call.1} parent=99 // pred_check
          %p2014 = pneg %p560
        $region126: #{tpu_custom_call.1} parent=99 // pred_check_branch
          %2016 = sbr.rel (%p2014) target = $region128
        $region127: #{tpu_custom_call.1} parent=99 // pred_region
          %2018 = vsyncadd %s2010, 0
          %s2019 = smul.addr %s49, 2
          %s2020 = scalar_lea.hbm %s20, %s2019
          %s2022 = sshll.u32 %s2013, 4
          %s2023 = int_to_ptr.vmem [resolvable:$true] %s2022
          %s2024 = sshll.u32 %s2020, 4
          %s2025 = int_to_ptr.hbm [resolvable:$true] %s2024
          %2027 = dma.vmem_to_hbm [thread:$0]  %s2023, 32, %s2025, %s2010
        $region128: #{tpu_custom_call.1} parent=99 // pred_fallthru
          _
      $region100: #{tpu_custom_call.1} parent=5 // pred_fallthru
        _
      %p2028 = scmp.le.s32.totalorder 2, %s40
      // Predicated region
      $region129: #{tpu_custom_call.1} parent=5 // pred_check
        %p2029 = pneg %p2028
      $region130: #{tpu_custom_call.1} parent=5 // pred_check_branch
        %2031 = sbr.rel (%p2029) target = $region132
      $region131: #{tpu_custom_call.1} parent=5 // pred_region
        %s2032 = ssub.s32 %s40, 2
        // Predicated region
        $region133: #{tpu_custom_call.1} parent=131 // pred_check
          %p2033 = pneg %p566
        $region134: #{tpu_custom_call.1} parent=131 // pred_check_branch
          %2035 = sbr.rel (%p2033) target = $region136
        $region135: #{tpu_custom_call.1} parent=131 // pred_region
          %s2036 = sand.u32 %s551, 1
          %s2037 = scalar_lea.sflag [#allocation6], %s2036
          %s2038 = sand.u32 %s551, 1
          %s2039 = smul.addr %s2038, 2
          %s2040 = scalar_lea.vmem [#allocation12], %s2039
          %2042 = dma.done %s2037, 32
        $region136: #{tpu_custom_call.1} parent=131 // pred_fallthru
          _
      $region132: #{tpu_custom_call.1} parent=5 // pred_fallthru
        _
    $region6: #{tpu_custom_call.1} parent=1 // loop_footer
      %s44 = sadd.s32 1, %s40
    $region7: #{tpu_custom_call.1} parent=1 // loop_footer_branch
      %39 = sbr.rel target = $region3
    $region8: #{tpu_custom_call.1} parent=1 // loop_exit
      _
    %2043 = vsyncpa [#allocation5], 1
    %s2044 = scalar_lea.sflag [#allocation5], 1
    %2045 = vsyncpa %s2044, 1
    %2046 = vsyncpa [#allocation8], 1
    %s2047 = scalar_lea.sflag [#allocation8], 1
    %2048 = vsyncpa %s2047, 1
    %2049 = vsyncpa [#allocation11], 1
    %s2050 = scalar_lea.sflag [#allocation11], 1
    %2051 = vsyncpa %s2050, 1
    %2052 = vsyncpa [#allocation6], 1
    %s2053 = scalar_lea.sflag [#allocation6], 1
    %2054 = vsyncpa %s2053, 1

</llo_original>
